<compile_context>
chip_gen: v7x
topology: tpu7x:2x2x1
jax: 0.10.0
libtpu: 0.0.40
codegen_flags: <defaults>
</compile_context>

<pallas_src>
import math

import jax
import jax.numpy as jnp
from jax.experimental import pallas as pl
from jax.experimental.pallas import tpu as pltpu


def _make_mha_kernel(with_attn, exp_dtype, exact_softmax_norm):
    """Builds the fused kernel body. `with_attn` / `exp_dtype` / `exact_softmax_norm` are static."""
    exp_is_f32 = jnp.dtype(exp_dtype) == jnp.dtype(jnp.float32)

    def kernel(skip_ref, q_in_ref, k_in_ref, v_in_ref,
               wq_ref, bq_ref, wk_ref, bk_ref, wv_ref, bv_ref,
               wskip_ref, bskip_ref, gmha_ref,
               lnw_ref, lnb_ref, w0_ref, b0_ref, w1_ref, b1_ref, gmlp_ref,
               *out_and_scratch):
        if with_attn:
            out_ref, attn_ref, kc_ref, vc_ref = out_and_scratch
        else:
            out_ref, kc_ref, vc_ref = out_and_scratch
            attn_ref = None

        f32 = jnp.float32
        TB, TQ, D = q_in_ref.shape
        S = k_in_ref.shape[1]
        H = wq_ref.shape[1]
        O = w1_ref.shape[1]

        # --- K/V projection: computed once per batch tile (first query tile) and cached in
        # VMEM scratch across the qi axis (which is therefore "arbitrary").  The K/V HBM blocks
        # are qi-invariant so Pallas already skips their re-fetch; this removes the redundant
        # re-projection compute on every later query tile.
        @pl.when(pl.program_id(1) == 0)
        def _():
            k_in = k_in_ref[...].reshape(TB * S, D)
            v_in = v_in_ref[...].reshape(TB * S, D)
            k = jnp.dot(k_in, wk_ref[...], preferred_element_type=f32) + bk_ref[...]
            v = jnp.dot(v_in, wv_ref[...], preferred_element_type=f32) + bv_ref[...]
            kc_ref[...] = k.reshape(TB, S, H)
            vc_ref[...] = v.reshape(TB, S, H)

        # --- Q / skip projections for this (batch tile, query tile).  Flatten (TB,TQ,D) ->
        # (TB*TQ, D) so the matmuls fill MXU rows.  Fold the sdpa 1/sqrt(H) scale into q
        # (touches S*H elements, not S*S); scaling after the bias keeps logits exact.
        q_in = q_in_ref[...].reshape(TB * TQ, D)
        skip = skip_ref[...].reshape(TB * TQ, D)
        scale = 1.0 / math.sqrt(float(H))
        q = (jnp.dot(q_in, wq_ref[...], preferred_element_type=f32) + bq_ref[...]) * scale
        skip_p = jnp.dot(skip, wskip_ref[...], preferred_element_type=f32) + bskip_ref[...]

        qb = q.reshape(TB, TQ, H)
        kb = kc_ref[...]
        vb = vc_ref[...]

        # Batched q @ k^T with the transpose folded into the contraction (no XLU transpose).
        logits = jnp.einsum("bqh,bkh->bqk", qb, kb, preferred_element_type=f32)  # (TB, TQ, S)

        # Softmax: max/sum/normalization in f32; exp optionally bf16 (single EUP slot is the
        # transcendental bottleneck over the (TQ,S) slab; v6e/v7x have a bf16 EUP path).
        m = jnp.max(logits, axis=-1, keepdims=True)
        shifted = logits - m
        e = jnp.exp(shifted) if exp_is_f32 else jnp.exp(shifted.astype(exp_dtype))
        denom = jnp.sum(e.astype(f32), axis=-1, keepdims=True)
        if exact_softmax_norm:
            inv = 1.0 / denom
        else:
            # NOTE: approx reciprocal -> returned attention rows sum to 1 only to ~1e-4.
            inv = pl.reciprocal(denom, approx=True)
        attn = e.astype(f32) * inv                                               # (TB, TQ, S)

        xb = jnp.einsum("bqk,bkh->bqh", attn.astype(vb.dtype), vb,
                        preferred_element_type=f32)                              # (TB, TQ, H)
        x = xb.reshape(TB * TQ, H)

        # macMHA: x = gamma_mha * attention_output + skip_projection (gamma: SMEM scalar).
        x = gmha_ref[0, 0] * x + skip_p

        # --- MLPBlock: LayerNorm(eps=1e-6, affine) -> dense0 -> gelu(tanh) -> dense1 -> MAC.
        mean = jnp.mean(x, axis=-1, keepdims=True)
        var = jnp.mean((x - mean) ** 2, axis=-1, keepdims=True)
        xn = (x - mean) * jax.lax.rsqrt(var + 1e-6)
        xn = xn * lnw_ref[...] + lnb_ref[...]

        h = jnp.dot(xn, w0_ref[...], preferred_element_type=f32) + b0_ref[...]
        c = jnp.float32(math.sqrt(2.0 / math.pi))
        h = 0.5 * h * (1.0 + jnp.tanh(c * (h + 0.044715 * h * h * h)))
        h = jnp.dot(h, w1_ref[...], preferred_element_type=f32) + b1_ref[...]

        y = gmlp_ref[0, 0] * h + x
        out_ref[...] = y.reshape(TB, TQ, O).astype(out_ref.dtype)
        if with_attn:
            attn_ref[...] = attn.astype(attn_ref.dtype)

    return kernel


def _largest_divisor(n, cap):
    for d in range(min(n, cap), 0, -1):
        if n % d == 0:
            return d
    return 1


def _choose_q_tile(S, max_q_tile, sub):
    if S <= max_q_tile:
        return S
    for d in range(min(S, max_q_tile), 0, -1):
        if S % d == 0 and d % sub == 0:
            return d
    # No sublane-aligned divisor <= max_q_tile; largest plain divisor (forces TB = 1 below).
    return _largest_divisor(S, max_q_tile)


def _vmem_budget_bytes():
    # Cap at ~7/8 of detected capacity but never above 56 MiB, so the scoped-VMEM request is
    # always satisfiable on v7x (64 MiB per TensorCore); v5e/v6e simply keep extra headroom.
    cap = 64 << 20
    try:
        info = pltpu.get_tpu_info()
        cap = int(getattr(info, "vmem_capacity_bytes", cap)) or cap
    except Exception:
        pass
    return min(int(cap * 7 // 8), 56 << 20)


def mha_block_forward(skip, qkv, params, *,
                      max_batch_tile=8, max_q_tile=256,
                      attn_dtype=jnp.bfloat16, return_attention_map=True,
                      softmax_exp_dtype=None, exact_softmax_norm=False):
    """Fused MultiHeadAttentionBlock forward.  Returns (y, attention_map_or_None)."""
    q_in, k_in, v_in = qkv
    B, S, D = skip.shape
    H = params["wq"].shape[1]
    O = params["w1"].shape[1]
    # The MAC residual (gamma_mlp * h + x) adds an (.., O) tensor to an (.., H) tensor.
    assert O == H, "MLP output_dim must equal head_size for the residual MAC to be well-defined"

    act_itemsize = jnp.dtype(skip.dtype).itemsize
    attn_itemsize = jnp.dtype(attn_dtype).itemsize
    sub = 8 * max(1, 4 // act_itemsize)   # packed sublane tile: f32 -> 8, bf16 -> 16, int8 -> 32

    # Batch tile: pack batch elements per grid step (fills MXU sublanes, amortizes ~0.35 us/step)
    # but keep B//TB >= 2 so the "parallel" batch axis can still shard across v7x's two
    # TensorCores (the qi axis is sequential because of the K/V cache).
    TB = _largest_divisor(B, max(1, min(max_batch_tile, max(1, B // 2))))
    TQ = _choose_q_tile(S, max_q_tile, sub)

    budget = _vmem_budget_bytes()

    def est_vmem(tb, tq):
        blk_in = 2 * act_itemsize * (2 * tb * tq * D + 2 * tb * S * D)   # double-buffered inputs
        blk_out = 2 * (tb * tq * O * 4 +
                       (tb * tq * S * attn_itemsize if return_attention_map else 0))
        weights = 4 * (4 * D * H + H * O + O * O + 8 * max(H, O))
        cache = 2 * tb * S * H * 4                                       # K/V projection cache
        live = 4 * tb * tq * max(S, 128) * 4                             # f32 logits/exp/attn
        return blk_in + blk_out + weights + cache + live

    # Shrink tiles until they fit the budget (never raise the limit past physical VMEM).
    while est_vmem(TB, TQ) > budget:
        if TB > 1:
            TB = _largest_divisor(B, max(1, TB // 2))
        elif TQ > sub and TQ % 2 == 0:
            TQ //= 2
        else:
            break
    if S % sub != 0 or TQ % sub != 0:
        TB = 1   # keep the in-kernel (TB, T, D) -> (TB*T, D) reshapes packed-sublane aligned

    grid = (B // TB, S // TQ)

    if softmax_exp_dtype is None:
        exp_dtype = (jnp.bfloat16
                     if (return_attention_map and jnp.dtype(attn_dtype) == jnp.dtype(jnp.bfloat16))
                     else jnp.float32)
    else:
        exp_dtype = softmax_exp_dtype

    qskip_spec = pl.BlockSpec((TB, TQ, D), lambda b, qi: (b, qi, 0))
    kv_spec = pl.BlockSpec((TB, S, D), lambda b, qi: (b, 0, 0))   # qi-invariant: no re-fetch

    def full_spec(shape):
        zeros = (0,) * len(shape)
        return pl.BlockSpec(shape, lambda b, qi: zeros)

    # (1,1) gammas live in SMEM as scalars — no padded VMEM tile, no vector load.
    smem_scalar_spec = pl.BlockSpec(memory_space=pltpu.MemorySpace.SMEM)

    in_specs = [
        qskip_spec, qskip_spec, kv_spec, kv_spec,          # skip, q_in, k_in, v_in
        full_spec((D, H)), full_spec((1, H)),              # wq, bq
        full_spec((D, H)), full_spec((1, H)),              # wk, bk
        full_spec((D, H)), full_spec((1, H)),              # wv, bv
        full_spec((D, H)), full_spec((1, H)),              # wskip, bskip
        smem_scalar_spec,                                  # gamma_mha
        full_spec((1, H)), full_spec((1, H)),              # ln weight, ln bias
        full_spec((H, O)), full_spec((1, O)),              # w0, b0
        full_spec((O, O)), full_spec((1, O)),              # w1, b1
        smem_scalar_spec,                                  # gamma_mlp
    ]

    y_spec = pl.BlockSpec((TB, TQ, O), lambda b, qi: (b, qi, 0))
    y_shape = jax.ShapeDtypeStruct((B, S, O), jnp.float32)
    if return_attention_map:
        out_specs = [y_spec, pl.BlockSpec((TB, TQ, S), lambda b, qi: (b, qi, 0))]
        out_shape = [y_shape, jax.ShapeDtypeStruct((B, S, S), attn_dtype)]
    else:
        out_specs = y_spec
        out_shape = y_shape

    fn = pl.pallas_call(
        _make_mha_kernel(return_attention_map, exp_dtype, exact_softmax_norm),
        grid=grid,
        in_specs=in_specs,
        out_specs=out_specs,
        out_shape=out_shape,
        scratch_shapes=[pltpu.VMEM((TB, S, H), jnp.float32),   # projected K cache
                        pltpu.VMEM((TB, S, H), jnp.float32)],  # projected V cache
        compiler_params=pltpu.CompilerParams(
            # batch axis: independent (megacore-shardable); qi axis: sequential, carries the
            # per-batch-tile K/V projection cache in VMEM scratch.
            dimension_semantics=("parallel", "arbitrary"),
            # Always set explicitly (v5e's scoped default is only 16 MiB) and never above
            # physical per-core VMEM (v7x: 64 MiB); tiles were shrunk to fit this same budget.
            vmem_limit_bytes=budget,
        ),
    )

    args = (skip, q_in, k_in, v_in,
            params["wq"], params["bq"], params["wk"], params["bk"],
            params["wv"], params["bv"], params["wskip"], params["bskip"],
            params["gamma_mha"],
            params["ln_w"], params["ln_b"], params["w0"], params["b0"],
            params["w1"], params["b1"], params["gamma_mlp"])
    if return_attention_map:
        y, attn = fn(*args)
        return y, attn
    return fn(*args), None


def mha_block_reference(skip, qkv, params):
    """Pure-JAX reference for correctness checking."""
    q_in, k_in, v_in = qkv
    q = q_in @ params["wq"] + params["bq"]
    k = k_in @ params["wk"] + params["bk"]
    v = v_in @ params["wv"] + params["bv"]
    skip_p = skip @ params["wskip"] + params["bskip"]

    H = q.shape[-1]
    logits = jnp.einsum("bqh,bkh->bqk", q, k) / jnp.sqrt(jnp.float32(H))
    attn = jax.nn.softmax(logits, axis=-1)
    x = jnp.einsum("bqk,bkh->bqh", attn, v)
    x = params["gamma_mha"][0, 0] * x + skip_p

    mean = jnp.mean(x, axis=-1, keepdims=True)
    var = jnp.mean((x - mean) ** 2, axis=-1, keepdims=True)
    xn = (x - mean) * jax.lax.rsqrt(var + 1e-6) * params["ln_w"] + params["ln_b"]
    h = xn @ params["w0"] + params["b0"]
    h = 0.5 * h * (1.0 + jnp.tanh(jnp.sqrt(2.0 / jnp.pi) * (h + 0.044715 * h ** 3)))
    h = h @ params["w1"] + params["b1"]
    y = params["gamma_mlp"][0, 0] * h + x
    return y, attn


if __name__ == "__main__":
    B, S, D, H = 2, 8, 32, 8   # batch, seq, latent_dim, head_size
    O = H                      # output_dim == head_size so the MLP residual MAC is well-defined

    key = jax.random.PRNGKey(0)
    ks = jax.random.split(key, 12)

    def w(k, shape, scale=0.05):
        return (scale * jax.random.normal(k, shape)).astype(jnp.float32)

    params = {
        "wq": w(ks[0], (D, H)), "bq": w(ks[1], (1, H)),
        "wk": w(ks[2], (D, H)), "bk": w(ks[3], (1, H)),
        "wv": w(ks[4], (D, H)), "bv": w(ks[5], (1, H)),
        "wskip": w(ks[6], (D, H)), "bskip": w(ks[7], (1, H)),
        # PyTorch inits the MAC gammas to 0.0; use 0.1 here so both branches contribute.
        "gamma_mha": jnp.full((1, 1), 0.1, jnp.float32),
        "ln_w": jnp.ones((1, H), jnp.float32),
        "ln_b": jnp.zeros((1, H), jnp.float32),
        "w0": w(ks[8], (H, O)), "b0": w(ks[9], (1, O)),
        "w1": w(ks[10], (O, O)), "b1": w(ks[11], (1, O)),
        "gamma_mlp": jnp.full((1, 1), 0.1, jnp.float32),
    }

    dkey = jax.random.split(jax.random.PRNGKey(1), 4)
    skip = jax.random.normal(dkey[0], (B, S, D), jnp.float32)
    qkv = (jax.random.normal(dkey[1], (B, S, D), jnp.float32),
           jax.random.normal(dkey[2], (B, S, D), jnp.float32),
           jax.random.normal(dkey[3], (B, S, D), jnp.float32))

    y_ref, attn_ref = mha_block_reference(skip, qkv, params)

    # 1) Default production config: bf16 attention map + bf16 softmax exp + approx reciprocal.
    y, attn_map = mha_block_forward(skip, qkv, params)
    jax.block_until_ready((y, attn_map))
    assert jnp.allclose(y, y_ref, atol=3e-3, rtol=3e-3), "output mismatch (default config)"
    assert jnp.allclose(attn_map.astype(jnp.float32), attn_ref, atol=1.5e-2, rtol=1.5e-2), \
        "attn mismatch (default config)"

    # 2) f32 attention map with exact softmax normalization (tight numeric check).
    y32, attn32 = mha_block_forward(skip, qkv, params, attn_dtype=jnp.float32,
                                    exact_softmax_norm=True)
    jax.block_until_ready((y32, attn32))
    assert jnp.allclose(y32, y_ref, atol=2e-3, rtol=2e-3), "output mismatch (f32 config)"
    assert jnp.allclose(attn32, attn_ref, atol=2e-3, rtol=2e-3), "attn mismatch (f32 config)"

    # 3) Attention map dropped entirely (no (B,S,S) writeback at all).
    y_na, attn_na = mha_block_forward(skip, qkv, params, return_attention_map=False)
    jax.block_until_ready(y_na)
    assert attn_na is None
    assert jnp.allclose(y_na, y_ref, atol=2e-3, rtol=2e-3), "output mismatch (no-map config)"

    # 4) bf16 activations (exercises the packed-sublane alignment guard + mixed-precision path).
    skip_bf = skip.astype(jnp.bfloat16)
    qkv_bf = tuple(t.astype(jnp.bfloat16) for t in qkv)
    y_bf, _ = mha_block_forward(skip_bf, qkv_bf, params, attn_dtype=jnp.float32)
    jax.block_until_ready(y_bf)
    y_bf_ref, _ = mha_block_reference(skip_bf, qkv_bf, params)
    assert jnp.allclose(y_bf, y_bf_ref, atol=1e-2, rtol=1e-2), "output mismatch (bf16 inputs)"

    print("KERNEL_OK")
</pallas_src>

<mosaic_0001>
module attributes {stable_mosaic.version = 11 : i64} {
  func.func @kernel(%arg0: i32, %arg1: i32, %arg2: memref<1x8x32xf32, #tpu.memory_space<vmem>>, %arg3: memref<1x8x32xf32, #tpu.memory_space<vmem>>, %arg4: memref<1x8x32xf32, #tpu.memory_space<vmem>>, %arg5: memref<1x8x32xf32, #tpu.memory_space<vmem>>, %arg6: memref<32x8xf32, #tpu.memory_space<vmem>>, %arg7: memref<1x8xf32, #tpu.memory_space<vmem>>, %arg8: memref<32x8xf32, #tpu.memory_space<vmem>>, %arg9: memref<1x8xf32, #tpu.memory_space<vmem>>, %arg10: memref<32x8xf32, #tpu.memory_space<vmem>>, %arg11: memref<1x8xf32, #tpu.memory_space<vmem>>, %arg12: memref<32x8xf32, #tpu.memory_space<vmem>>, %arg13: memref<1x8xf32, #tpu.memory_space<vmem>>, %arg14: memref<1x1xf32, #tpu.memory_space<smem>>, %arg15: memref<1x8xf32, #tpu.memory_space<vmem>>, %arg16: memref<1x8xf32, #tpu.memory_space<vmem>>, %arg17: memref<8x8xf32, #tpu.memory_space<vmem>>, %arg18: memref<1x8xf32, #tpu.memory_space<vmem>>, %arg19: memref<8x8xf32, #tpu.memory_space<vmem>>, %arg20: memref<1x8xf32, #tpu.memory_space<vmem>>, %arg21: memref<1x1xf32, #tpu.memory_space<smem>>, %arg22: memref<1x8x8xf32, #tpu.memory_space<vmem>>, %arg23: memref<1x8x8xbf16, #tpu.memory_space<vmem>>, %arg24: memref<1x8x8xf32, #tpu.memory_space<vmem>>, %arg25: memref<1x8x8xf32, #tpu.memory_space<vmem>>) attributes {dimension_semantics = [#tpu.dimension_semantics<parallel>, #tpu.dimension_semantics<arbitrary>], iteration_bounds = array<i64: 2, 1>, scalar_prefetch = 0 : i64, scratch_operands = 2 : i64, tpu.core_type = #tpu.core_type<tc>, window_params = [{transform_indices = @transform_0, window_bounds = array<i64: 1, 8, 32>}, {transform_indices = @transform_1, window_bounds = array<i64: 1, 8, 32>}, {transform_indices = @transform_2, window_bounds = array<i64: 1, 8, 32>}, {transform_indices = @transform_3, window_bounds = array<i64: 1, 8, 32>}, {pipeline_mode = #tpu.pipeline_mode<synchronous>, transform_indices = @transform_4, window_bounds = array<i64: 32, 8>}, {pipeline_mode = #tpu.pipeline_mode<synchronous>, transform_indices = @transform_5, window_bounds = array<i64: 1, 8>}, {pipeline_mode = #tpu.pipeline_mode<synchronous>, transform_indices = @transform_6, window_bounds = array<i64: 32, 8>}, {pipeline_mode = #tpu.pipeline_mode<synchronous>, transform_indices = @transform_7, window_bounds = array<i64: 1, 8>}, {pipeline_mode = #tpu.pipeline_mode<synchronous>, transform_indices = @transform_8, window_bounds = array<i64: 32, 8>}, {pipeline_mode = #tpu.pipeline_mode<synchronous>, transform_indices = @transform_9, window_bounds = array<i64: 1, 8>}, {pipeline_mode = #tpu.pipeline_mode<synchronous>, transform_indices = @transform_10, window_bounds = array<i64: 32, 8>}, {pipeline_mode = #tpu.pipeline_mode<synchronous>, transform_indices = @transform_11, window_bounds = array<i64: 1, 8>}, {transform_indices = @transform_12, window_bounds = array<i64: 1, 1>}, {pipeline_mode = #tpu.pipeline_mode<synchronous>, transform_indices = @transform_13, window_bounds = array<i64: 1, 8>}, {pipeline_mode = #tpu.pipeline_mode<synchronous>, transform_indices = @transform_14, window_bounds = array<i64: 1, 8>}, {pipeline_mode = #tpu.pipeline_mode<synchronous>, transform_indices = @transform_15, window_bounds = array<i64: 8, 8>}, {pipeline_mode = #tpu.pipeline_mode<synchronous>, transform_indices = @transform_16, window_bounds = array<i64: 1, 8>}, {pipeline_mode = #tpu.pipeline_mode<synchronous>, transform_indices = @transform_17, window_bounds = array<i64: 8, 8>}, {pipeline_mode = #tpu.pipeline_mode<synchronous>, transform_indices = @transform_18, window_bounds = array<i64: 1, 8>}, {transform_indices = @transform_19, window_bounds = array<i64: 1, 1>}, {transform_indices = @transform_20, window_bounds = array<i64: 1, 8, 8>}, {transform_indices = @transform_21, window_bounds = array<i64: 1, 8, 8>}]} {
    %c0_i32 = arith.constant 0 : i32
    %0 = arith.cmpi eq, %arg1, %c0_i32 : i32
    %1 = arith.extui %0 : i1 to i32
    %c0_i32_0 = arith.constant 0 : i32
    %2 = arith.cmpi ne, %1, %c0_i32_0 : i32
    scf.if %2 {
      %c0_59 = arith.constant 0 : index
      %c0_60 = arith.constant 0 : index
      %c0_61 = arith.constant 0 : index
      %97 = vector.load %arg4[%c0_59, %c0_60, %c0_61] : memref<1x8x32xf32, #tpu.memory_space<vmem>>, vector<1x8x32xf32>
      %98 = vector.shape_cast %97 : vector<1x8x32xf32> to vector<8x32xf32>
      %c0_62 = arith.constant 0 : index
      %c0_63 = arith.constant 0 : index
      %c0_64 = arith.constant 0 : index
      %99 = vector.load %arg5[%c0_62, %c0_63, %c0_64] : memref<1x8x32xf32, #tpu.memory_space<vmem>>, vector<1x8x32xf32>
      %100 = vector.shape_cast %99 : vector<1x8x32xf32> to vector<8x32xf32>
      %c0_65 = arith.constant 0 : index
      %c0_66 = arith.constant 0 : index
      %101 = vector.load %arg8[%c0_65, %c0_66] : memref<32x8xf32, #tpu.memory_space<vmem>>, vector<32x8xf32>
      %cst_67 = arith.constant dense<0.000000e+00> : vector<8x8xf32>
      %102 = tpu.matmul %98, %101, %cst_67 {dimension_numbers = #tpu.dot_dimension_numbers<[1], [0], [0], [1], [0, 0, 1, 1], [], []>} : vector<8x32xf32>, vector<32x8xf32>, vector<8x8xf32> -> vector<8x8xf32>
      %c0_68 = arith.constant 0 : index
      %c0_69 = arith.constant 0 : index
      %103 = vector.load %arg9[%c0_68, %c0_69] : memref<1x8xf32, #tpu.memory_space<vmem>>, vector<1x8xf32>
      %104 = vector.broadcast %103 : vector<1x8xf32> to vector<8x8xf32>
      %105 = arith.addf %102, %104 : vector<8x8xf32>
      %c0_70 = arith.constant 0 : index
      %c0_71 = arith.constant 0 : index
      %106 = vector.load %arg10[%c0_70, %c0_71] : memref<32x8xf32, #tpu.memory_space<vmem>>, vector<32x8xf32>
      %cst_72 = arith.constant dense<0.000000e+00> : vector<8x8xf32>
      %107 = tpu.matmul %100, %106, %cst_72 {dimension_numbers = #tpu.dot_dimension_numbers<[1], [0], [0], [1], [0, 0, 1, 1], [], []>} : vector<8x32xf32>, vector<32x8xf32>, vector<8x8xf32> -> vector<8x8xf32>
      %c0_73 = arith.constant 0 : index
      %c0_74 = arith.constant 0 : index
      %108 = vector.load %arg11[%c0_73, %c0_74] : memref<1x8xf32, #tpu.memory_space<vmem>>, vector<1x8xf32>
      %109 = vector.broadcast %108 : vector<1x8xf32> to vector<8x8xf32>
      %110 = arith.addf %107, %109 : vector<8x8xf32>
      %111 = vector.shape_cast %105 : vector<8x8xf32> to vector<1x8x8xf32>
      %c0_75 = arith.constant 0 : index
      %c0_76 = arith.constant 0 : index
      %c0_77 = arith.constant 0 : index
      %112 = vector.load %arg24[%c0_75, %c0_76, %c0_77] : memref<1x8x8xf32, #tpu.memory_space<vmem>>, vector<1x8x8xf32>
      tpu.vector_store %arg24[%c0_75, %c0_76, %c0_77], %111 {strides = array<i32>} : memref<1x8x8xf32, #tpu.memory_space<vmem>>, vector<1x8x8xf32>,
      %113 = vector.shape_cast %110 : vector<8x8xf32> to vector<1x8x8xf32>
      %c0_78 = arith.constant 0 : index
      %c0_79 = arith.constant 0 : index
      %c0_80 = arith.constant 0 : index
      %114 = vector.load %arg25[%c0_78, %c0_79, %c0_80] : memref<1x8x8xf32, #tpu.memory_space<vmem>>, vector<1x8x8xf32>
      tpu.vector_store %arg25[%c0_78, %c0_79, %c0_80], %113 {strides = array<i32>} : memref<1x8x8xf32, #tpu.memory_space<vmem>>, vector<1x8x8xf32>,
    } else {
    }
    %c0 = arith.constant 0 : index
    %c0_1 = arith.constant 0 : index
    %c0_2 = arith.constant 0 : index
    %3 = vector.load %arg3[%c0, %c0_1, %c0_2] : memref<1x8x32xf32, #tpu.memory_space<vmem>>, vector<1x8x32xf32>
    %4 = vector.shape_cast %3 : vector<1x8x32xf32> to vector<8x32xf32>
    %c0_3 = arith.constant 0 : index
    %c0_4 = arith.constant 0 : index
    %c0_5 = arith.constant 0 : index
    %5 = vector.load %arg2[%c0_3, %c0_4, %c0_5] : memref<1x8x32xf32, #tpu.memory_space<vmem>>, vector<1x8x32xf32>
    %6 = vector.shape_cast %5 : vector<1x8x32xf32> to vector<8x32xf32>
    %c0_6 = arith.constant 0 : index
    %c0_7 = arith.constant 0 : index
    %7 = vector.load %arg6[%c0_6, %c0_7] : memref<32x8xf32, #tpu.memory_space<vmem>>, vector<32x8xf32>
    %cst = arith.constant dense<0.000000e+00> : vector<8x8xf32>
    %8 = tpu.matmul %4, %7, %cst {dimension_numbers = #tpu.dot_dimension_numbers<[1], [0], [0], [1], [0, 0, 1, 1], [], []>} : vector<8x32xf32>, vector<32x8xf32>, vector<8x8xf32> -> vector<8x8xf32>
    %c0_8 = arith.constant 0 : index
    %c0_9 = arith.constant 0 : index
    %9 = vector.load %arg7[%c0_8, %c0_9] : memref<1x8xf32, #tpu.memory_space<vmem>>, vector<1x8xf32>
    %10 = vector.broadcast %9 : vector<1x8xf32> to vector<8x8xf32>
    %11 = arith.addf %8, %10 : vector<8x8xf32>
    %cst_10 = arith.constant 0.353553385 : f32
    %12 = vector.broadcast %cst_10 : f32 to vector<8x8xf32>
    %13 = arith.mulf %11, %12 : vector<8x8xf32>
    %c0_11 = arith.constant 0 : index
    %c0_12 = arith.constant 0 : index
    %14 = vector.load %arg12[%c0_11, %c0_12] : memref<32x8xf32, #tpu.memory_space<vmem>>, vector<32x8xf32>
    %cst_13 = arith.constant dense<0.000000e+00> : vector<8x8xf32>
    %15 = tpu.matmul %6, %14, %cst_13 {dimension_numbers = #tpu.dot_dimension_numbers<[1], [0], [0], [1], [0, 0, 1, 1], [], []>} : vector<8x32xf32>, vector<32x8xf32>, vector<8x8xf32> -> vector<8x8xf32>
    %c0_14 = arith.constant 0 : index
    %c0_15 = arith.constant 0 : index
    %16 = vector.load %arg13[%c0_14, %c0_15] : memref<1x8xf32, #tpu.memory_space<vmem>>, vector<1x8xf32>
    %17 = vector.broadcast %16 : vector<1x8xf32> to vector<8x8xf32>
    %18 = arith.addf %15, %17 : vector<8x8xf32>
    %19 = vector.shape_cast %13 : vector<8x8xf32> to vector<1x8x8xf32>
    %c0_16 = arith.constant 0 : index
    %c0_17 = arith.constant 0 : index
    %c0_18 = arith.constant 0 : index
    %20 = vector.load %arg24[%c0_16, %c0_17, %c0_18] : memref<1x8x8xf32, #tpu.memory_space<vmem>>, vector<1x8x8xf32>
    %c0_19 = arith.constant 0 : index
    %c0_20 = arith.constant 0 : index
    %c0_21 = arith.constant 0 : index
    %21 = vector.load %arg25[%c0_19, %c0_20, %c0_21] : memref<1x8x8xf32, #tpu.memory_space<vmem>>, vector<1x8x8xf32>
    "tpu.trace_start"() <{level = 10 : i32, message = "bqh,bkh->bqk"}> : () -> ()
    %cst_22 = arith.constant dense<0.000000e+00> : vector<1x8x8xf32>
    %22 = tpu.matmul %19, %20, %cst_22 {dimension_numbers = #tpu.dot_dimension_numbers<[2], [2], [1], [1], [0, 0, 0, 1, 1, 1], [0], [0]>} : vector<1x8x8xf32>, vector<1x8x8xf32>, vector<1x8x8xf32> -> vector<1x8x8xf32>
    "tpu.trace_stop"() : () -> ()
    %cst_23 = arith.constant dense<0xFF800000> : vector<1x8xf32>
    %23 = vector.multi_reduction <maximumf>, %22, %cst_23 [2] : vector<1x8x8xf32> to vector<1x8xf32>
    %24 = vector.shape_cast %23 : vector<1x8xf32> to vector<1x8x1xf32>
    %25 = vector.broadcast %24 : vector<1x8x1xf32> to vector<1x8x8xf32>
    %26 = arith.subf %22, %25 : vector<1x8x8xf32>
    %27 = arith.truncf %26 : vector<1x8x8xf32> to vector<1x8x8xbf16>
    %28 = math.exp %27 : vector<1x8x8xbf16>
    %29 = arith.extf %28 : vector<1x8x8xbf16> to vector<1x8x8xf32>
    %cst_24 = arith.constant dense<0.000000e+00> : vector<1x8xf32>
    %30 = vector.multi_reduction <add>, %29, %cst_24 [2] : vector<1x8x8xf32> to vector<1x8xf32>
    %31 = vector.shape_cast %30 : vector<1x8xf32> to vector<1x8x1xf32>
    %32 = tpu.reciprocal %31 {approx = true} : vector<1x8x1xf32> -> vector<1x8x1xf32>
    %33 = arith.extf %28 : vector<1x8x8xbf16> to vector<1x8x8xf32>
    %34 = vector.broadcast %32 : vector<1x8x1xf32> to vector<1x8x8xf32>
    %35 = arith.mulf %33, %34 : vector<1x8x8xf32>
    "tpu.trace_start"() <{level = 10 : i32, message = "bqk,bkh->bqh"}> : () -> ()
    %cst_25 = arith.constant dense<0.000000e+00> : vector<1x8x8xf32>
    %36 = tpu.matmul %35, %21, %cst_25 {dimension_numbers = #tpu.dot_dimension_numbers<[2], [1], [1], [2], [0, 0, 0, 1, 1, 2], [0], [0]>} : vector<1x8x8xf32>, vector<1x8x8xf32>, vector<1x8x8xf32> -> vector<1x8x8xf32>
    "tpu.trace_stop"() : () -> ()
    %37 = vector.shape_cast %36 : vector<1x8x8xf32> to vector<8x8xf32>
    %c0_26 = arith.constant 0 : index
    %c0_27 = arith.constant 0 : index
    %38 = memref.load %arg14[%c0_26, %c0_27] : memref<1x1xf32, #tpu.memory_space<smem>>
    %39 = vector.broadcast %38 : f32 to vector<8x8xf32>
    %40 = arith.mulf %39, %37 : vector<8x8xf32>
    %41 = arith.addf %40, %18 : vector<8x8xf32>
    %cst_28 = arith.constant dense<0.000000e+00> : vector<8xf32>
    %42 = vector.multi_reduction <add>, %41, %cst_28 [1] : vector<8x8xf32> to vector<8xf32>
    %43 = vector.shape_cast %42 : vector<8xf32> to vector<8x1xf32>
    %cst_29 = arith.constant 8.000000e+00 : f32
    %44 = vector.broadcast %cst_29 : f32 to vector<8x1xf32>
    %45 = arith.divf %43, %44 : vector<8x1xf32>
    %46 = vector.broadcast %45 : vector<8x1xf32> to vector<8x8xf32>
    %47 = arith.subf %41, %46 : vector<8x8xf32>
    %48 = arith.mulf %47, %47 : vector<8x8xf32>
    %cst_30 = arith.constant dense<0.000000e+00> : vector<8xf32>
    %49 = vector.multi_reduction <add>, %48, %cst_30 [1] : vector<8x8xf32> to vector<8xf32>
    %50 = vector.shape_cast %49 : vector<8xf32> to vector<8x1xf32>
    %cst_31 = arith.constant 8.000000e+00 : f32
    %51 = vector.broadcast %cst_31 : f32 to vector<8x1xf32>
    %52 = arith.divf %50, %51 : vector<8x1xf32>
    %53 = vector.broadcast %45 : vector<8x1xf32> to vector<8x8xf32>
    %54 = arith.subf %41, %53 : vector<8x8xf32>
    %cst_32 = arith.constant 9.99999997E-7 : f32
    %55 = vector.broadcast %cst_32 : f32 to vector<8x1xf32>
    %56 = arith.addf %52, %55 : vector<8x1xf32>
    %57 = math.rsqrt %56 : vector<8x1xf32>
    %58 = vector.broadcast %57 : vector<8x1xf32> to vector<8x8xf32>
    %59 = arith.mulf %54, %58 : vector<8x8xf32>
    %c0_33 = arith.constant 0 : index
    %c0_34 = arith.constant 0 : index
    %60 = vector.load %arg15[%c0_33, %c0_34] : memref<1x8xf32, #tpu.memory_space<vmem>>, vector<1x8xf32>
    %61 = vector.broadcast %60 : vector<1x8xf32> to vector<8x8xf32>
    %62 = arith.mulf %59, %61 : vector<8x8xf32>
    %c0_35 = arith.constant 0 : index
    %c0_36 = arith.constant 0 : index
    %63 = vector.load %arg16[%c0_35, %c0_36] : memref<1x8xf32, #tpu.memory_space<vmem>>, vector<1x8xf32>
    %64 = vector.broadcast %63 : vector<1x8xf32> to vector<8x8xf32>
    %65 = arith.addf %62, %64 : vector<8x8xf32>
    %c0_37 = arith.constant 0 : index
    %c0_38 = arith.constant 0 : index
    %66 = vector.load %arg17[%c0_37, %c0_38] : memref<8x8xf32, #tpu.memory_space<vmem>>, vector<8x8xf32>
    %cst_39 = arith.constant dense<0.000000e+00> : vector<8x8xf32>
    %67 = tpu.matmul %65, %66, %cst_39 {dimension_numbers = #tpu.dot_dimension_numbers<[1], [0], [0], [1], [0, 0, 1, 1], [], []>} : vector<8x8xf32>, vector<8x8xf32>, vector<8x8xf32> -> vector<8x8xf32>
    %c0_40 = arith.constant 0 : index
    %c0_41 = arith.constant 0 : index
    %68 = vector.load %arg18[%c0_40, %c0_41] : memref<1x8xf32, #tpu.memory_space<vmem>>, vector<1x8xf32>
    %69 = vector.broadcast %68 : vector<1x8xf32> to vector<8x8xf32>
    %70 = arith.addf %67, %69 : vector<8x8xf32>
    %cst_42 = arith.constant 5.000000e-01 : f32
    %71 = vector.broadcast %cst_42 : f32 to vector<8x8xf32>
    %72 = arith.mulf %71, %70 : vector<8x8xf32>
    %cst_43 = arith.constant 4.471500e-02 : f32
    %73 = vector.broadcast %cst_43 : f32 to vector<8x8xf32>
    %74 = arith.mulf %73, %70 : vector<8x8xf32>
    %75 = arith.mulf %74, %70 : vector<8x8xf32>
    %76 = arith.mulf %75, %70 : vector<8x8xf32>
    %77 = arith.addf %70, %76 : vector<8x8xf32>
    %cst_44 = arith.constant 0.797884583 : f32
    %78 = vector.broadcast %cst_44 : f32 to vector<8x8xf32>
    %79 = arith.mulf %78, %77 : vector<8x8xf32>
    %80 = math.tanh %79 : vector<8x8xf32>
    %cst_45 = arith.constant 1.000000e+00 : f32
    %81 = vector.broadcast %cst_45 : f32 to vector<8x8xf32>
    %82 = arith.addf %81, %80 : vector<8x8xf32>
    %83 = arith.mulf %72, %82 : vector<8x8xf32>
    %c0_46 = arith.constant 0 : index
    %c0_47 = arith.constant 0 : index
    %84 = vector.load %arg19[%c0_46, %c0_47] : memref<8x8xf32, #tpu.memory_space<vmem>>, vector<8x8xf32>
    %cst_48 = arith.constant dense<0.000000e+00> : vector<8x8xf32>
    %85 = tpu.matmul %83, %84, %cst_48 {dimension_numbers = #tpu.dot_dimension_numbers<[1], [0], [0], [1], [0, 0, 1, 1], [], []>} : vector<8x8xf32>, vector<8x8xf32>, vector<8x8xf32> -> vector<8x8xf32>
    %c0_49 = arith.constant 0 : index
    %c0_50 = arith.constant 0 : index
    %86 = vector.load %arg20[%c0_49, %c0_50] : memref<1x8xf32, #tpu.memory_space<vmem>>, vector<1x8xf32>
    %87 = vector.broadcast %86 : vector<1x8xf32> to vector<8x8xf32>
    %88 = arith.addf %85, %87 : vector<8x8xf32>
    %c0_51 = arith.constant 0 : index
    %c0_52 = arith.constant 0 : index
    %89 = memref.load %arg21[%c0_51, %c0_52] : memref<1x1xf32, #tpu.memory_space<smem>>
    %90 = vector.broadcast %89 : f32 to vector<8x8xf32>
    %91 = arith.mulf %90, %88 : vector<8x8xf32>
    %92 = arith.addf %91, %41 : vector<8x8xf32>
    %93 = vector.shape_cast %92 : vector<8x8xf32> to vector<1x8x8xf32>
    %c0_53 = arith.constant 0 : index
    %c0_54 = arith.constant 0 : index
    %c0_55 = arith.constant 0 : index
    %94 = vector.load %arg22[%c0_53, %c0_54, %c0_55] : memref<1x8x8xf32, #tpu.memory_space<vmem>>, vector<1x8x8xf32>
    tpu.vector_store %arg22[%c0_53, %c0_54, %c0_55], %93 {strides = array<i32>} : memref<1x8x8xf32, #tpu.memory_space<vmem>>, vector<1x8x8xf32>,
    %95 = arith.truncf %35 : vector<1x8x8xf32> to vector<1x8x8xbf16>
    %c0_56 = arith.constant 0 : index
    %c0_57 = arith.constant 0 : index
    %c0_58 = arith.constant 0 : index
    %96 = vector.load %arg23[%c0_56, %c0_57, %c0_58] : memref<1x8x8xbf16, #tpu.memory_space<vmem>>, vector<1x8x8xbf16>
    tpu.vector_store %arg23[%c0_56, %c0_57, %c0_58], %95 {strides = array<i32>} : memref<1x8x8xbf16, #tpu.memory_space<vmem>>, vector<1x8x8xbf16>,
    return
  }
  func.func @transform_0(%arg0: i32, %arg1: i32) -> (i32, i32, i32) {
    %c0_i32 = arith.constant 0 : i32
    %c0_i32_0 = arith.constant 0 : i32
    return %arg0, %arg1, %c0_i32 : i32, i32, i32
  }
  func.func @transform_1(%arg0: i32, %arg1: i32) -> (i32, i32, i32) {
    %c0_i32 = arith.constant 0 : i32
    %c0_i32_0 = arith.constant 0 : i32
    return %arg0, %arg1, %c0_i32 : i32, i32, i32
  }
  func.func @transform_2(%arg0: i32, %arg1: i32) -> (i32, i32, i32) {
    %c0_i32 = arith.constant 0 : i32
    %c0_i32_0 = arith.constant 0 : i32
    %c0_i32_1 = arith.constant 0 : i32
    return %arg0, %c0_i32, %c0_i32_0 : i32, i32, i32
  }
  func.func @transform_3(%arg0: i32, %arg1: i32) -> (i32, i32, i32) {
    %c0_i32 = arith.constant 0 : i32
    %c0_i32_0 = arith.constant 0 : i32
    %c0_i32_1 = arith.constant 0 : i32
    return %arg0, %c0_i32, %c0_i32_0 : i32, i32, i32
  }
  func.func @transform_4(%arg0: i32, %arg1: i32) -> (i32, i32) {
    %c0_i32 = arith.constant 0 : i32
    %c0_i32_0 = arith.constant 0 : i32
    %c0_i32_1 = arith.constant 0 : i32
    return %c0_i32, %c0_i32_0 : i32, i32
  }
  func.func @transform_5(%arg0: i32, %arg1: i32) -> (i32, i32) {
    %c0_i32 = arith.constant 0 : i32
    %c0_i32_0 = arith.constant 0 : i32
    %c0_i32_1 = arith.constant 0 : i32
    return %c0_i32, %c0_i32_0 : i32, i32
  }
  func.func @transform_6(%arg0: i32, %arg1: i32) -> (i32, i32) {
    %c0_i32 = arith.constant 0 : i32
    %c0_i32_0 = arith.constant 0 : i32
    %c0_i32_1 = arith.constant 0 : i32
    return %c0_i32, %c0_i32_0 : i32, i32
  }
  func.func @transform_7(%arg0: i32, %arg1: i32) -> (i32, i32) {
    %c0_i32 = arith.constant 0 : i32
    %c0_i32_0 = arith.constant 0 : i32
    %c0_i32_1 = arith.constant 0 : i32
    return %c0_i32, %c0_i32_0 : i32, i32
  }
  func.func @transform_8(%arg0: i32, %arg1: i32) -> (i32, i32) {
    %c0_i32 = arith.constant 0 : i32
    %c0_i32_0 = arith.constant 0 : i32
    %c0_i32_1 = arith.constant 0 : i32
    return %c0_i32, %c0_i32_0 : i32, i32
  }
  func.func @transform_9(%arg0: i32, %arg1: i32) -> (i32, i32) {
    %c0_i32 = arith.constant 0 : i32
    %c0_i32_0 = arith.constant 0 : i32
    %c0_i32_1 = arith.constant 0 : i32
    return %c0_i32, %c0_i32_0 : i32, i32
  }
  func.func @transform_10(%arg0: i32, %arg1: i32) -> (i32, i32) {
    %c0_i32 = arith.constant 0 : i32
    %c0_i32_0 = arith.constant 0 : i32
    %c0_i32_1 = arith.constant 0 : i32
    return %c0_i32, %c0_i32_0 : i32, i32
  }
  func.func @transform_11(%arg0: i32, %arg1: i32) -> (i32, i32) {
    %c0_i32 = arith.constant 0 : i32
    %c0_i32_0 = arith.constant 0 : i32
    %c0_i32_1 = arith.constant 0 : i32
    return %c0_i32, %c0_i32_0 : i32, i32
  }
  func.func @transform_12(%arg0: i32, %arg1: i32) -> (i32, i32) {
    %c0_i32 = arith.constant 0 : i32
    %c0_i32_0 = arith.constant 0 : i32
    %c0_i32_1 = arith.constant 0 : i32
    return %c0_i32, %c0_i32_0 : i32, i32
  }
  func.func @transform_13(%arg0: i32, %arg1: i32) -> (i32, i32) {
    %c0_i32 = arith.constant 0 : i32
    %c0_i32_0 = arith.constant 0 : i32
    %c0_i32_1 = arith.constant 0 : i32
    return %c0_i32, %c0_i32_0 : i32, i32
  }
  func.func @transform_14(%arg0: i32, %arg1: i32) -> (i32, i32) {
    %c0_i32 = arith.constant 0 : i32
    %c0_i32_0 = arith.constant 0 : i32
    %c0_i32_1 = arith.constant 0 : i32
    return %c0_i32, %c0_i32_0 : i32, i32
  }
  func.func @transform_15(%arg0: i32, %arg1: i32) -> (i32, i32) {
    %c0_i32 = arith.constant 0 : i32
    %c0_i32_0 = arith.constant 0 : i32
    %c0_i32_1 = arith.constant 0 : i32
    return %c0_i32, %c0_i32_0 : i32, i32
  }
  func.func @transform_16(%arg0: i32, %arg1: i32) -> (i32, i32) {
    %c0_i32 = arith.constant 0 : i32
    %c0_i32_0 = arith.constant 0 : i32
    %c0_i32_1 = arith.constant 0 : i32
    return %c0_i32, %c0_i32_0 : i32, i32
  }
  func.func @transform_17(%arg0: i32, %arg1: i32) -> (i32, i32) {
    %c0_i32 = arith.constant 0 : i32
    %c0_i32_0 = arith.constant 0 : i32
    %c0_i32_1 = arith.constant 0 : i32
    return %c0_i32, %c0_i32_0 : i32, i32
  }
  func.func @transform_18(%arg0: i32, %arg1: i32) -> (i32, i32) {
    %c0_i32 = arith.constant 0 : i32
    %c0_i32_0 = arith.constant 0 : i32
    %c0_i32_1 = arith.constant 0 : i32
    return %c0_i32, %c0_i32_0 : i32, i32
  }
  func.func @transform_19(%arg0: i32, %arg1: i32) -> (i32, i32) {
    %c0_i32 = arith.constant 0 : i32
    %c0_i32_0 = arith.constant 0 : i32
    %c0_i32_1 = arith.constant 0 : i32
    return %c0_i32, %c0_i32_0 : i32, i32
  }
  func.func @transform_20(%arg0: i32, %arg1: i32) -> (i32, i32, i32) {
    %c0_i32 = arith.constant 0 : i32
    %c0_i32_0 = arith.constant 0 : i32
    return %arg0, %arg1, %c0_i32 : i32, i32, i32
  }
  func.func @transform_21(%arg0: i32, %arg1: i32) -> (i32, i32, i32) {
    %c0_i32 = arith.constant 0 : i32
    %c0_i32_0 = arith.constant 0 : i32
    return %arg0, %arg1, %c0_i32 : i32, i32, i32
  }
}

</mosaic_0001>

<llo_original>
// kernel: tpu_custom_call.1
$region0: #{tpu_custom_call.1}
  #allocation0 [shape = 'u32[]', space=smem, size = 0x4, offset = 0x4, fixed_abs, tag = 'smem constant byte address 0x4 - core index']
  #allocation1 [shape = 'u32[144,128]{1,0:T(1,128)}', space=vmem, size = 0x12000, scoped, tag = 'internal scratch']
  #allocation2 [shape = 'f32[1,8,8]{2,1,0:T(8,128)}', space=vmem, size = 0x1000, scoped, tag = 'scratch operand']
  #allocation3 [shape = 'f32[1,8,8]{2,1,0:T(8,128)}', space=vmem, size = 0x1000, scoped, tag = 'scratch operand']
  #allocation4 [shape = 'f32[1,1]{1,0:T(1,128)S(6)}', space=smem, size = 0x200, scoped, tag = 'scoped memory for tpu_custom_call.1']
  #allocation5 [shape = 'f32[1,1]{1,0:T(1,128)S(6)}', space=smem, size = 0x200, scoped, tag = 'scoped memory for tpu_custom_call.1']
  %s0 = inlined_call_operand.vmem [shape: f32[2,8,32], index: 0, kind: input, shape index: {}]
  %s1 = inlined_call_operand.vmem [shape: f32[2,8,32], index: 1, kind: input, shape index: {}]
  %s2 = inlined_call_operand.vmem [shape: f32[2,8,32], index: 2, kind: input, shape index: {}]
  %s3 = inlined_call_operand.vmem [shape: f32[2,8,32], index: 3, kind: input, shape index: {}]
  %s4 = inlined_call_operand.vmem [shape: f32[32,8], index: 4, kind: input, shape index: {}]
  %s5 = inlined_call_operand.vmem [shape: f32[1,8], index: 5, kind: input, shape index: {}]
  %s6 = inlined_call_operand.vmem [shape: f32[32,8], index: 6, kind: input, shape index: {}]
  %s7 = inlined_call_operand.vmem [shape: f32[1,8], index: 7, kind: input, shape index: {}]
  %s8 = inlined_call_operand.vmem [shape: f32[32,8], index: 8, kind: input, shape index: {}]
  %s9 = inlined_call_operand.vmem [shape: f32[1,8], index: 9, kind: input, shape index: {}]
  %s10 = inlined_call_operand.vmem [shape: f32[32,8], index: 10, kind: input, shape index: {}]
  %s11 = inlined_call_operand.vmem [shape: f32[1,8], index: 11, kind: input, shape index: {}]
  %s12 = inlined_call_operand.<no memory space> [shape: f32[1,1], index: 12, kind: input, shape index: {}]
  %s13 = inlined_call_operand.vmem [shape: f32[1,8], index: 13, kind: input, shape index: {}]
  %s14 = inlined_call_operand.vmem [shape: f32[1,8], index: 14, kind: input, shape index: {}]
  %s15 = inlined_call_operand.vmem [shape: f32[8,8], index: 15, kind: input, shape index: {}]
  %s16 = inlined_call_operand.vmem [shape: f32[1,8], index: 16, kind: input, shape index: {}]
  %s17 = inlined_call_operand.vmem [shape: f32[8,8], index: 17, kind: input, shape index: {}]
  %s18 = inlined_call_operand.vmem [shape: f32[1,8], index: 18, kind: input, shape index: {}]
  %s19 = inlined_call_operand.<no memory space> [shape: f32[1,1], index: 19, kind: input, shape index: {}]
  %s20 = inlined_call_operand.hbm [shape: f32[2,8,8], index: 20, kind: output, shape index: {0}]
  %s21 = inlined_call_operand.hbm [shape: bf16[2,8,8], index: 21, kind: output, shape index: {1}]
  %22 = xla_tuple %s20, %s21
  %s23 = sld [smem:[#allocation0]]
  $region125: #{tpu_custom_call.1} parent=0
    _
  %s25 = ssub.s32 1, %s23
  %s26 = scalar_select 0, %s25, %s23
  %27 = sst [smem:[#allocation4]] %s12
  %28 = sst [smem:[#allocation5]] %s19
  $region1: #{tpu_custom_call.1} parent=0
    #allocation6 [shape = 'u8[8192]{0}', space=vmem, size = 0x2000, scoped, tag = 'output window, operand 0']
    #allocation7 [shape = 's32[2]{0}', space=sflag, size = 0x8, scoped, tag = 'scoped memory for tpu_custom_call.1']
    #allocation8 [shape = 'u8[4096]{0}', space=vmem, size = 0x1000, scoped, tag = 'output window, operand 1']
    #allocation9 [shape = 's32[2]{0}', space=sflag, size = 0x8, scoped, tag = 'scoped memory for tpu_custom_call.1']
    %29 = vsyncpa [#allocation7], 0
    %s30 = scalar_lea.sflag [#allocation7], 1
    %31 = vsyncpa %s30, 0
    %32 = vsyncpa [#allocation9], 0
    %s33 = scalar_lea.sflag [#allocation9], 1
    %34 = vsyncpa %s33, 0
    loop: start=0, step=1, limit=4
    $region2: #{tpu_custom_call.1} parent=1 // loop_pre_header
      _
    $region3: #{tpu_custom_call.1} parent=1 // loop_header
      %s36 = sphi 0, %s40
      %p37 = scmp.ge.s32.totalorder %s36, 4
      %s43 = sphi 0, %s55
      %s44 = sphi 0, %s51
      %s45 = sphi 0, %s43
      %s46 = sphi 0, %s44
      %s47 = sphi 0, %s45
      %s48 = sphi 0, %s46
      %s60 = sphi 0, %s62
      %s63 = sphi 0, %s60
      %s64 = sphi 0, %s63
      %s80 = sphi 0, %s64
      %s88 = sphi 0, %s90
      %s91 = sphi 0, %s88
      %s92 = sphi 0, %s91
      %s108 = sphi 0, %s92
      %s114 = sphi 0, %s116
      %s117 = sphi 0, %s114
      %s118 = sphi 0, %s117
      %s134 = sphi 0, %s118
      %s140 = sphi 0, %s142
      %s143 = sphi 0, %s140
      %s144 = sphi 0, %s143
      %s160 = sphi 0, %s144
      %s164 = sphi 0, %s164
      %s166 = sphi 0, %s164
      %s167 = sphi 0, %s166
      %s181 = sphi 0, %s167
      %s185 = sphi 0, %s185
      %s187 = sphi 0, %s185
      %s188 = sphi 0, %s187
      %s202 = sphi 0, %s188
      %s206 = sphi 0, %s206
      %s208 = sphi 0, %s206
      %s209 = sphi 0, %s208
      %s223 = sphi 0, %s209
      %s227 = sphi 0, %s227
      %s229 = sphi 0, %s227
      %s230 = sphi 0, %s229
      %s244 = sphi 0, %s230
      %s248 = sphi 0, %s248
      %s250 = sphi 0, %s248
      %s251 = sphi 0, %s250
      %s265 = sphi 0, %s251
      %s269 = sphi 0, %s269
      %s271 = sphi 0, %s269
      %s272 = sphi 0, %s271
      %s286 = sphi 0, %s272
      %s290 = sphi 0, %s290
      %s292 = sphi 0, %s290
      %s293 = sphi 0, %s292
      %s307 = sphi 0, %s293
      %s311 = sphi 0, %s311
      %s313 = sphi 0, %s311
      %s314 = sphi 0, %s313
      %s328 = sphi 0, %s314
      %s332 = sphi 0, %s332
      %s334 = sphi 0, %s332
      %s335 = sphi 0, %s334
      %s349 = sphi 0, %s335
      %s353 = sphi 0, %s353
      %s355 = sphi 0, %s353
      %s356 = sphi 0, %s355
      %s370 = sphi 0, %s356
      %s374 = sphi 0, %s374
      %s376 = sphi 0, %s374
      %s377 = sphi 0, %s376
      %s391 = sphi 0, %s377
      %s395 = sphi 0, %s395
      %s397 = sphi 0, %s395
      %s398 = sphi 0, %s397
      %s412 = sphi 0, %s398
      %s416 = sphi 0, %s416
      %s418 = sphi 0, %s416
      %s419 = sphi 0, %s418
      %s433 = sphi 0, %s419
      %s437 = sphi 0, %s437
      %s439 = sphi 0, %s437
      %s440 = sphi 0, %s439
      %s454 = sphi 0, %s440
      %s458 = sphi 0, %s458
      %s460 = sphi 0, %s458
      %s461 = sphi 0, %s460
      %s475 = sphi 0, %s461
      %s479 = sphi 0, %s479
      %s481 = sphi 0, %s479
      %s482 = sphi 0, %s481
      %s496 = sphi 0, %s482
      %s504 = sphi 0, %s506
      %s507 = sphi 0, %s504
      %s508 = sphi 0, %s507
      %s524 = sphi 0, %s508
      %s532 = sphi 0, %s534
      %s535 = sphi 0, %s532
      %s536 = sphi 0, %s535
      %s552 = sphi 0, %s536
    $region4: #{tpu_custom_call.1} parent=1 // loop_header_branch
      %39 = sbr.rel (%p37) target = $region8
    $region5: #{tpu_custom_call.1} parent=1 // loop_body
      %s41 = ssub.s32 %s36, 1
      %s42 = ssub.s32 %s36, 2
      %s49 = sadd.s32 1, %s44
      %p50 = scmp.ge.s32.totalorder %s49, 1
      %s51 = scalar_select %p50, 0, %s49
      %s52 = sadd.s32 1, %s43
      %s53 = scalar_select %p50, %s52, %s43
      %p54 = scmp.ge.s32.totalorder %s53, 2
      %s55 = scalar_select %p54, 0, %s53
      %s56 = ssub.s32 %s43, %s55
      %s57 = ssub.s32 %s44, %s51
      %s58 = sor.u32 %s56, %s57
      %p59 = scmp.eq.s32.totalorder %s58, 0
      %s61 = sadd.s32 %s60, 1
      %s62 = scalar_select %p59, %s60, %s61
      %p65 = pneg %p59
      %p66 = scmp.eq.s32.totalorder %s36, 1
      %p67 = por %p65, %p66
      %p68 = scmp.ne.s32.totalorder %s60, %s63
      %p69 = scmp.eq.s32.totalorder %s36, 0
      %p70 = por %p68, %p69
      %p71 = scmp.ne.s32.totalorder %s60, %s63
      %p72 = scmp.eq.s32.totalorder %s41, 1
      %p73 = por %p71, %p72
      %p74 = scmp.ne.s32.totalorder %s63, %s64
      %p75 = scmp.eq.s32.totalorder %s41, 0
      %p76 = por %p74, %p75
      %p77 = scmp.ne.s32.totalorder %s63, %s64
      %p78 = scmp.eq.s32.totalorder %s42, 1
      %p79 = por %p77, %p78
      %p81 = scmp.ne.s32.totalorder %s64, %s80
      %p82 = scmp.eq.s32.totalorder %s42, 0
      %p83 = por %p81, %p82
      %s84 = ssub.s32 %s43, %s55
      %s85 = ssub.s32 %s44, %s51
      %s86 = sor.u32 %s84, %s85
      %p87 = scmp.eq.s32.totalorder %s86, 0
      %s89 = sadd.s32 %s88, 1
      %s90 = scalar_select %p87, %s88, %s89
      %p93 = pneg %p87
      %p94 = scmp.eq.s32.totalorder %s36, 1
      %p95 = por %p93, %p94
      %p96 = scmp.ne.s32.totalorder %s88, %s91
      %p97 = scmp.eq.s32.totalorder %s36, 0
      %p98 = por %p96, %p97
      %p99 = scmp.ne.s32.totalorder %s88, %s91
      %p100 = scmp.eq.s32.totalorder %s41, 1
      %p101 = por %p99, %p100
      %p102 = scmp.ne.s32.totalorder %s91, %s92
      %p103 = scmp.eq.s32.totalorder %s41, 0
      %p104 = por %p102, %p103
      %p105 = scmp.ne.s32.totalorder %s91, %s92
      %p106 = scmp.eq.s32.totalorder %s42, 1
      %p107 = por %p105, %p106
      %p109 = scmp.ne.s32.totalorder %s92, %s108
      %p110 = scmp.eq.s32.totalorder %s42, 0
      %p111 = por %p109, %p110
      %s112 = ssub.s32 %s43, %s55
      %p113 = scmp.eq.s32.totalorder %s112, 0
      %s115 = sadd.s32 %s114, 1
      %s116 = scalar_select %p113, %s114, %s115
      %p119 = pneg %p113
      %p120 = scmp.eq.s32.totalorder %s36, 1
      %p121 = por %p119, %p120
      %p122 = scmp.ne.s32.totalorder %s114, %s117
      %p123 = scmp.eq.s32.totalorder %s36, 0
      %p124 = por %p122, %p123
      %p125 = scmp.ne.s32.totalorder %s114, %s117
      %p126 = scmp.eq.s32.totalorder %s41, 1
      %p127 = por %p125, %p126
      %p128 = scmp.ne.s32.totalorder %s117, %s118
      %p129 = scmp.eq.s32.totalorder %s41, 0
      %p130 = por %p128, %p129
      %p131 = scmp.ne.s32.totalorder %s117, %s118
      %p132 = scmp.eq.s32.totalorder %s42, 1
      %p133 = por %p131, %p132
      %p135 = scmp.ne.s32.totalorder %s118, %s134
      %p136 = scmp.eq.s32.totalorder %s42, 0
      %p137 = por %p135, %p136
      %s138 = ssub.s32 %s43, %s55
      %p139 = scmp.eq.s32.totalorder %s138, 0
      %s141 = sadd.s32 %s140, 1
      %s142 = scalar_select %p139, %s140, %s141
      %p145 = pneg %p139
      %p146 = scmp.eq.s32.totalorder %s36, 1
      %p147 = por %p145, %p146
      %p148 = scmp.ne.s32.totalorder %s140, %s143
      %p149 = scmp.eq.s32.totalorder %s36, 0
      %p150 = por %p148, %p149
      %p151 = scmp.ne.s32.totalorder %s140, %s143
      %p152 = scmp.eq.s32.totalorder %s41, 1
      %p153 = por %p151, %p152
      %p154 = scmp.ne.s32.totalorder %s143, %s144
      %p155 = scmp.eq.s32.totalorder %s41, 0
      %p156 = por %p154, %p155
      %p157 = scmp.ne.s32.totalorder %s143, %s144
      %p158 = scmp.eq.s32.totalorder %s42, 1
      %p159 = por %p157, %p158
      %p161 = scmp.ne.s32.totalorder %s144, %s160
      %p162 = scmp.eq.s32.totalorder %s42, 0
      %p163 = por %p161, %p162
      %s165 = sadd.s32 %s164, 1
      %p168 = scmp.eq.s32.totalorder %s36, 1
      %p169 = scmp.ne.s32.totalorder %s164, %s166
      %p170 = scmp.eq.s32.totalorder %s36, 0
      %p171 = por %p169, %p170
      %p172 = scmp.ne.s32.totalorder %s164, %s166
      %p173 = scmp.eq.s32.totalorder %s41, 1
      %p174 = por %p172, %p173
      %p175 = scmp.ne.s32.totalorder %s166, %s167
      %p176 = scmp.eq.s32.totalorder %s41, 0
      %p177 = por %p175, %p176
      %p178 = scmp.ne.s32.totalorder %s166, %s167
      %p179 = scmp.eq.s32.totalorder %s42, 1
      %p180 = por %p178, %p179
      %p182 = scmp.ne.s32.totalorder %s167, %s181
      %p183 = scmp.eq.s32.totalorder %s42, 0
      %p184 = por %p182, %p183
      %s186 = sadd.s32 %s185, 1
      %p189 = scmp.eq.s32.totalorder %s36, 1
      %p190 = scmp.ne.s32.totalorder %s185, %s187
      %p191 = scmp.eq.s32.totalorder %s36, 0
      %p192 = por %p190, %p191
      %p193 = scmp.ne.s32.totalorder %s185, %s187
      %p194 = scmp.eq.s32.totalorder %s41, 1
      %p195 = por %p193, %p194
      %p196 = scmp.ne.s32.totalorder %s187, %s188
      %p197 = scmp.eq.s32.totalorder %s41, 0
      %p198 = por %p196, %p197
      %p199 = scmp.ne.s32.totalorder %s187, %s188
      %p200 = scmp.eq.s32.totalorder %s42, 1
      %p201 = por %p199, %p200
      %p203 = scmp.ne.s32.totalorder %s188, %s202
      %p204 = scmp.eq.s32.totalorder %s42, 0
      %p205 = por %p203, %p204
      %s207 = sadd.s32 %s206, 1
      %p210 = scmp.eq.s32.totalorder %s36, 1
      %p211 = scmp.ne.s32.totalorder %s206, %s208
      %p212 = scmp.eq.s32.totalorder %s36, 0
      %p213 = por %p211, %p212
      %p214 = scmp.ne.s32.totalorder %s206, %s208
      %p215 = scmp.eq.s32.totalorder %s41, 1
      %p216 = por %p214, %p215
      %p217 = scmp.ne.s32.totalorder %s208, %s209
      %p218 = scmp.eq.s32.totalorder %s41, 0
      %p219 = por %p217, %p218
      %p220 = scmp.ne.s32.totalorder %s208, %s209
      %p221 = scmp.eq.s32.totalorder %s42, 1
      %p222 = por %p220, %p221
      %p224 = scmp.ne.s32.totalorder %s209, %s223
      %p225 = scmp.eq.s32.totalorder %s42, 0
      %p226 = por %p224, %p225
      %s228 = sadd.s32 %s227, 1
      %p231 = scmp.eq.s32.totalorder %s36, 1
      %p232 = scmp.ne.s32.totalorder %s227, %s229
      %p233 = scmp.eq.s32.totalorder %s36, 0
      %p234 = por %p232, %p233
      %p235 = scmp.ne.s32.totalorder %s227, %s229
      %p236 = scmp.eq.s32.totalorder %s41, 1
      %p237 = por %p235, %p236
      %p238 = scmp.ne.s32.totalorder %s229, %s230
      %p239 = scmp.eq.s32.totalorder %s41, 0
      %p240 = por %p238, %p239
      %p241 = scmp.ne.s32.totalorder %s229, %s230
      %p242 = scmp.eq.s32.totalorder %s42, 1
      %p243 = por %p241, %p242
      %p245 = scmp.ne.s32.totalorder %s230, %s244
      %p246 = scmp.eq.s32.totalorder %s42, 0
      %p247 = por %p245, %p246
      %s249 = sadd.s32 %s248, 1
      %p252 = scmp.eq.s32.totalorder %s36, 1
      %p253 = scmp.ne.s32.totalorder %s248, %s250
      %p254 = scmp.eq.s32.totalorder %s36, 0
      %p255 = por %p253, %p254
      %p256 = scmp.ne.s32.totalorder %s248, %s250
      %p257 = scmp.eq.s32.totalorder %s41, 1
      %p258 = por %p256, %p257
      %p259 = scmp.ne.s32.totalorder %s250, %s251
      %p260 = scmp.eq.s32.totalorder %s41, 0
      %p261 = por %p259, %p260
      %p262 = scmp.ne.s32.totalorder %s250, %s251
      %p263 = scmp.eq.s32.totalorder %s42, 1
      %p264 = por %p262, %p263
      %p266 = scmp.ne.s32.totalorder %s251, %s265
      %p267 = scmp.eq.s32.totalorder %s42, 0
      %p268 = por %p266, %p267
      %s270 = sadd.s32 %s269, 1
      %p273 = scmp.eq.s32.totalorder %s36, 1
      %p274 = scmp.ne.s32.totalorder %s269, %s271
      %p275 = scmp.eq.s32.totalorder %s36, 0
      %p276 = por %p274, %p275
      %p277 = scmp.ne.s32.totalorder %s269, %s271
      %p278 = scmp.eq.s32.totalorder %s41, 1
      %p279 = por %p277, %p278
      %p280 = scmp.ne.s32.totalorder %s271, %s272
      %p281 = scmp.eq.s32.totalorder %s41, 0
      %p282 = por %p280, %p281
      %p283 = scmp.ne.s32.totalorder %s271, %s272
      %p284 = scmp.eq.s32.totalorder %s42, 1
      %p285 = por %p283, %p284
      %p287 = scmp.ne.s32.totalorder %s272, %s286
      %p288 = scmp.eq.s32.totalorder %s42, 0
      %p289 = por %p287, %p288
      %s291 = sadd.s32 %s290, 1
      %p294 = scmp.eq.s32.totalorder %s36, 1
      %p295 = scmp.ne.s32.totalorder %s290, %s292
      %p296 = scmp.eq.s32.totalorder %s36, 0
      %p297 = por %p295, %p296
      %p298 = scmp.ne.s32.totalorder %s290, %s292
      %p299 = scmp.eq.s32.totalorder %s41, 1
      %p300 = por %p298, %p299
      %p301 = scmp.ne.s32.totalorder %s292, %s293
      %p302 = scmp.eq.s32.totalorder %s41, 0
      %p303 = por %p301, %p302
      %p304 = scmp.ne.s32.totalorder %s292, %s293
      %p305 = scmp.eq.s32.totalorder %s42, 1
      %p306 = por %p304, %p305
      %p308 = scmp.ne.s32.totalorder %s293, %s307
      %p309 = scmp.eq.s32.totalorder %s42, 0
      %p310 = por %p308, %p309
      %s312 = sadd.s32 %s311, 1
      %p315 = scmp.eq.s32.totalorder %s36, 1
      %p316 = scmp.ne.s32.totalorder %s311, %s313
      %p317 = scmp.eq.s32.totalorder %s36, 0
      %p318 = por %p316, %p317
      %p319 = scmp.ne.s32.totalorder %s311, %s313
      %p320 = scmp.eq.s32.totalorder %s41, 1
      %p321 = por %p319, %p320
      %p322 = scmp.ne.s32.totalorder %s313, %s314
      %p323 = scmp.eq.s32.totalorder %s41, 0
      %p324 = por %p322, %p323
      %p325 = scmp.ne.s32.totalorder %s313, %s314
      %p326 = scmp.eq.s32.totalorder %s42, 1
      %p327 = por %p325, %p326
      %p329 = scmp.ne.s32.totalorder %s314, %s328
      %p330 = scmp.eq.s32.totalorder %s42, 0
      %p331 = por %p329, %p330
      %s333 = sadd.s32 %s332, 1
      %p336 = scmp.eq.s32.totalorder %s36, 1
      %p337 = scmp.ne.s32.totalorder %s332, %s334
      %p338 = scmp.eq.s32.totalorder %s36, 0
      %p339 = por %p337, %p338
      %p340 = scmp.ne.s32.totalorder %s332, %s334
      %p341 = scmp.eq.s32.totalorder %s41, 1
      %p342 = por %p340, %p341
      %p343 = scmp.ne.s32.totalorder %s334, %s335
      %p344 = scmp.eq.s32.totalorder %s41, 0
      %p345 = por %p343, %p344
      %p346 = scmp.ne.s32.totalorder %s334, %s335
      %p347 = scmp.eq.s32.totalorder %s42, 1
      %p348 = por %p346, %p347
      %p350 = scmp.ne.s32.totalorder %s335, %s349
      %p351 = scmp.eq.s32.totalorder %s42, 0
      %p352 = por %p350, %p351
      %s354 = sadd.s32 %s353, 1
      %p357 = scmp.eq.s32.totalorder %s36, 1
      %p358 = scmp.ne.s32.totalorder %s353, %s355
      %p359 = scmp.eq.s32.totalorder %s36, 0
      %p360 = por %p358, %p359
      %p361 = scmp.ne.s32.totalorder %s353, %s355
      %p362 = scmp.eq.s32.totalorder %s41, 1
      %p363 = por %p361, %p362
      %p364 = scmp.ne.s32.totalorder %s355, %s356
      %p365 = scmp.eq.s32.totalorder %s41, 0
      %p366 = por %p364, %p365
      %p367 = scmp.ne.s32.totalorder %s355, %s356
      %p368 = scmp.eq.s32.totalorder %s42, 1
      %p369 = por %p367, %p368
      %p371 = scmp.ne.s32.totalorder %s356, %s370
      %p372 = scmp.eq.s32.totalorder %s42, 0
      %p373 = por %p371, %p372
      %s375 = sadd.s32 %s374, 1
      %p378 = scmp.eq.s32.totalorder %s36, 1
      %p379 = scmp.ne.s32.totalorder %s374, %s376
      %p380 = scmp.eq.s32.totalorder %s36, 0
      %p381 = por %p379, %p380
      %p382 = scmp.ne.s32.totalorder %s374, %s376
      %p383 = scmp.eq.s32.totalorder %s41, 1
      %p384 = por %p382, %p383
      %p385 = scmp.ne.s32.totalorder %s376, %s377
      %p386 = scmp.eq.s32.totalorder %s41, 0
      %p387 = por %p385, %p386
      %p388 = scmp.ne.s32.totalorder %s376, %s377
      %p389 = scmp.eq.s32.totalorder %s42, 1
      %p390 = por %p388, %p389
      %p392 = scmp.ne.s32.totalorder %s377, %s391
      %p393 = scmp.eq.s32.totalorder %s42, 0
      %p394 = por %p392, %p393
      %s396 = sadd.s32 %s395, 1
      %p399 = scmp.eq.s32.totalorder %s36, 1
      %p400 = scmp.ne.s32.totalorder %s395, %s397
      %p401 = scmp.eq.s32.totalorder %s36, 0
      %p402 = por %p400, %p401
      %p403 = scmp.ne.s32.totalorder %s395, %s397
      %p404 = scmp.eq.s32.totalorder %s41, 1
      %p405 = por %p403, %p404
      %p406 = scmp.ne.s32.totalorder %s397, %s398
      %p407 = scmp.eq.s32.totalorder %s41, 0
      %p408 = por %p406, %p407
      %p409 = scmp.ne.s32.totalorder %s397, %s398
      %p410 = scmp.eq.s32.totalorder %s42, 1
      %p411 = por %p409, %p410
      %p413 = scmp.ne.s32.totalorder %s398, %s412
      %p414 = scmp.eq.s32.totalorder %s42, 0
      %p415 = por %p413, %p414
      %s417 = sadd.s32 %s416, 1
      %p420 = scmp.eq.s32.totalorder %s36, 1
      %p421 = scmp.ne.s32.totalorder %s416, %s418
      %p422 = scmp.eq.s32.totalorder %s36, 0
      %p423 = por %p421, %p422
      %p424 = scmp.ne.s32.totalorder %s416, %s418
      %p425 = scmp.eq.s32.totalorder %s41, 1
      %p426 = por %p424, %p425
      %p427 = scmp.ne.s32.totalorder %s418, %s419
      %p428 = scmp.eq.s32.totalorder %s41, 0
      %p429 = por %p427, %p428
      %p430 = scmp.ne.s32.totalorder %s418, %s419
      %p431 = scmp.eq.s32.totalorder %s42, 1
      %p432 = por %p430, %p431
      %p434 = scmp.ne.s32.totalorder %s419, %s433
      %p435 = scmp.eq.s32.totalorder %s42, 0
      %p436 = por %p434, %p435
      %s438 = sadd.s32 %s437, 1
      %p441 = scmp.eq.s32.totalorder %s36, 1
      %p442 = scmp.ne.s32.totalorder %s437, %s439
      %p443 = scmp.eq.s32.totalorder %s36, 0
      %p444 = por %p442, %p443
      %p445 = scmp.ne.s32.totalorder %s437, %s439
      %p446 = scmp.eq.s32.totalorder %s41, 1
      %p447 = por %p445, %p446
      %p448 = scmp.ne.s32.totalorder %s439, %s440
      %p449 = scmp.eq.s32.totalorder %s41, 0
      %p450 = por %p448, %p449
      %p451 = scmp.ne.s32.totalorder %s439, %s440
      %p452 = scmp.eq.s32.totalorder %s42, 1
      %p453 = por %p451, %p452
      %p455 = scmp.ne.s32.totalorder %s440, %s454
      %p456 = scmp.eq.s32.totalorder %s42, 0
      %p457 = por %p455, %p456
      %s459 = sadd.s32 %s458, 1
      %p462 = scmp.eq.s32.totalorder %s36, 1
      %p463 = scmp.ne.s32.totalorder %s458, %s460
      %p464 = scmp.eq.s32.totalorder %s36, 0
      %p465 = por %p463, %p464
      %p466 = scmp.ne.s32.totalorder %s458, %s460
      %p467 = scmp.eq.s32.totalorder %s41, 1
      %p468 = por %p466, %p467
      %p469 = scmp.ne.s32.totalorder %s460, %s461
      %p470 = scmp.eq.s32.totalorder %s41, 0
      %p471 = por %p469, %p470
      %p472 = scmp.ne.s32.totalorder %s460, %s461
      %p473 = scmp.eq.s32.totalorder %s42, 1
      %p474 = por %p472, %p473
      %p476 = scmp.ne.s32.totalorder %s461, %s475
      %p477 = scmp.eq.s32.totalorder %s42, 0
      %p478 = por %p476, %p477
      %s480 = sadd.s32 %s479, 1
      %p483 = scmp.eq.s32.totalorder %s36, 1
      %p484 = scmp.ne.s32.totalorder %s479, %s481
      %p485 = scmp.eq.s32.totalorder %s36, 0
      %p486 = por %p484, %p485
      %p487 = scmp.ne.s32.totalorder %s479, %s481
      %p488 = scmp.eq.s32.totalorder %s41, 1
      %p489 = por %p487, %p488
      %p490 = scmp.ne.s32.totalorder %s481, %s482
      %p491 = scmp.eq.s32.totalorder %s41, 0
      %p492 = por %p490, %p491
      %p493 = scmp.ne.s32.totalorder %s481, %s482
      %p494 = scmp.eq.s32.totalorder %s42, 1
      %p495 = por %p493, %p494
      %p497 = scmp.ne.s32.totalorder %s482, %s496
      %p498 = scmp.eq.s32.totalorder %s42, 0
      %p499 = por %p497, %p498
      %s500 = ssub.s32 %s43, %s55
      %s501 = ssub.s32 %s44, %s51
      %s502 = sor.u32 %s500, %s501
      %p503 = scmp.eq.s32.totalorder %s502, 0
      %s505 = sadd.s32 %s504, 1
      %s506 = scalar_select %p503, %s504, %s505
      %p509 = pneg %p503
      %p510 = scmp.eq.s32.totalorder %s36, 1
      %p511 = por %p509, %p510
      %p512 = scmp.ne.s32.totalorder %s504, %s507
      %p513 = scmp.eq.s32.totalorder %s36, 0
      %p514 = por %p512, %p513
      %p515 = scmp.ne.s32.totalorder %s504, %s507
      %p516 = scmp.eq.s32.totalorder %s41, 1
      %p517 = por %p515, %p516
      %p518 = scmp.ne.s32.totalorder %s507, %s508
      %p519 = scmp.eq.s32.totalorder %s41, 0
      %p520 = por %p518, %p519
      %p521 = scmp.ne.s32.totalorder %s507, %s508
      %p522 = scmp.eq.s32.totalorder %s42, 1
      %p523 = por %p521, %p522
      %p525 = scmp.ne.s32.totalorder %s508, %s524
      %p526 = scmp.eq.s32.totalorder %s42, 0
      %p527 = por %p525, %p526
      %s528 = ssub.s32 %s43, %s55
      %s529 = ssub.s32 %s44, %s51
      %s530 = sor.u32 %s528, %s529
      %p531 = scmp.eq.s32.totalorder %s530, 0
      %s533 = sadd.s32 %s532, 1
      %s534 = scalar_select %p531, %s532, %s533
      %p537 = pneg %p531
      %p538 = scmp.eq.s32.totalorder %s36, 1
      %p539 = por %p537, %p538
      %p540 = scmp.ne.s32.totalorder %s532, %s535
      %p541 = scmp.eq.s32.totalorder %s36, 0
      %p542 = por %p540, %p541
      %p543 = scmp.ne.s32.totalorder %s532, %s535
      %p544 = scmp.eq.s32.totalorder %s41, 1
      %p545 = por %p543, %p544
      %p546 = scmp.ne.s32.totalorder %s535, %s536
      %p547 = scmp.eq.s32.totalorder %s41, 0
      %p548 = por %p546, %p547
      %p549 = scmp.ne.s32.totalorder %s535, %s536
      %p550 = scmp.eq.s32.totalorder %s42, 1
      %p551 = por %p549, %p550
      %p553 = scmp.ne.s32.totalorder %s536, %s552
      %p554 = scmp.eq.s32.totalorder %s42, 0
      %p555 = por %p553, %p554
      %p556 = scmp.le.s32.totalorder 1, %s36
      %p557 = scmp.lt.s32.totalorder %s36, 3
      %p558 = pnand %p556, %p557
      %p559 = pneg %p558
      // Predicated region
      $region9: #{tpu_custom_call.1} parent=5 // pred_check
        _
      $region10: #{tpu_custom_call.1} parent=5 // pred_check_branch
        %561 = sbr.rel (%p558) target = $region12
      $region11: #{tpu_custom_call.1} parent=5 // pred_region
        %s562 = ssub.s32 %s36, 1
        // Predicated region
        $region13: #{tpu_custom_call.1} parent=11 // pred_check
          %p563 = pneg %p177
        $region14: #{tpu_custom_call.1} parent=11 // pred_check_branch
          %565 = sbr.rel (%p563) target = $region16
        $region15: #{tpu_custom_call.1} parent=11 // pred_region
          _
        $region16: #{tpu_custom_call.1} parent=11 // pred_fallthru
          _
        // Predicated region
        $region17: #{tpu_custom_call.1} parent=11 // pred_check
          %p566 = pneg %p198
        $region18: #{tpu_custom_call.1} parent=11 // pred_check_branch
          %568 = sbr.rel (%p566) target = $region20
        $region19: #{tpu_custom_call.1} parent=11 // pred_region
          _
        $region20: #{tpu_custom_call.1} parent=11 // pred_fallthru
          _
        // Predicated region
        $region21: #{tpu_custom_call.1} parent=11 // pred_check
          %p569 = pneg %p219
        $region22: #{tpu_custom_call.1} parent=11 // pred_check_branch
          %571 = sbr.rel (%p569) target = $region24
        $region23: #{tpu_custom_call.1} parent=11 // pred_region
          _
        $region24: #{tpu_custom_call.1} parent=11 // pred_fallthru
          _
        // Predicated region
        $region25: #{tpu_custom_call.1} parent=11 // pred_check
          %p572 = pneg %p240
        $region26: #{tpu_custom_call.1} parent=11 // pred_check_branch
          %574 = sbr.rel (%p572) target = $region28
        $region27: #{tpu_custom_call.1} parent=11 // pred_region
          _
        $region28: #{tpu_custom_call.1} parent=11 // pred_fallthru
          _
        // Predicated region
        $region29: #{tpu_custom_call.1} parent=11 // pred_check
          %p575 = pneg %p261
        $region30: #{tpu_custom_call.1} parent=11 // pred_check_branch
          %577 = sbr.rel (%p575) target = $region32
        $region31: #{tpu_custom_call.1} parent=11 // pred_region
          _
        $region32: #{tpu_custom_call.1} parent=11 // pred_fallthru
          _
        // Predicated region
        $region33: #{tpu_custom_call.1} parent=11 // pred_check
          %p578 = pneg %p282
        $region34: #{tpu_custom_call.1} parent=11 // pred_check_branch
          %580 = sbr.rel (%p578) target = $region36
        $region35: #{tpu_custom_call.1} parent=11 // pred_region
          _
        $region36: #{tpu_custom_call.1} parent=11 // pred_fallthru
          _
        // Predicated region
        $region37: #{tpu_custom_call.1} parent=11 // pred_check
          %p581 = pneg %p303
        $region38: #{tpu_custom_call.1} parent=11 // pred_check_branch
          %583 = sbr.rel (%p581) target = $region40
        $region39: #{tpu_custom_call.1} parent=11 // pred_region
          _
        $region40: #{tpu_custom_call.1} parent=11 // pred_fallthru
          _
        // Predicated region
        $region41: #{tpu_custom_call.1} parent=11 // pred_check
          %p584 = pneg %p324
        $region42: #{tpu_custom_call.1} parent=11 // pred_check_branch
          %586 = sbr.rel (%p584) target = $region44
        $region43: #{tpu_custom_call.1} parent=11 // pred_region
          _
        $region44: #{tpu_custom_call.1} parent=11 // pred_fallthru
          _
        // Predicated region
        $region45: #{tpu_custom_call.1} parent=11 // pred_check
          %p587 = pneg %p345
        $region46: #{tpu_custom_call.1} parent=11 // pred_check_branch
          %589 = sbr.rel (%p587) target = $region48
        $region47: #{tpu_custom_call.1} parent=11 // pred_region
          _
        $region48: #{tpu_custom_call.1} parent=11 // pred_fallthru
          _
        // Predicated region
        $region49: #{tpu_custom_call.1} parent=11 // pred_check
          %p590 = pneg %p366
        $region50: #{tpu_custom_call.1} parent=11 // pred_check_branch
          %592 = sbr.rel (%p590) target = $region52
        $region51: #{tpu_custom_call.1} parent=11 // pred_region
          _
        $region52: #{tpu_custom_call.1} parent=11 // pred_fallthru
          _
        // Predicated region
        $region53: #{tpu_custom_call.1} parent=11 // pred_check
          %p593 = pneg %p387
        $region54: #{tpu_custom_call.1} parent=11 // pred_check_branch
          %595 = sbr.rel (%p593) target = $region56
        $region55: #{tpu_custom_call.1} parent=11 // pred_region
          _
        $region56: #{tpu_custom_call.1} parent=11 // pred_fallthru
          _
        // Predicated region
        $region57: #{tpu_custom_call.1} parent=11 // pred_check
          %p596 = pneg %p408
        $region58: #{tpu_custom_call.1} parent=11 // pred_check_branch
          %598 = sbr.rel (%p596) target = $region60
        $region59: #{tpu_custom_call.1} parent=11 // pred_region
          _
        $region60: #{tpu_custom_call.1} parent=11 // pred_fallthru
          _
        // Predicated region
        $region61: #{tpu_custom_call.1} parent=11 // pred_check
          %p599 = pneg %p429
        $region62: #{tpu_custom_call.1} parent=11 // pred_check_branch
          %601 = sbr.rel (%p599) target = $region64
        $region63: #{tpu_custom_call.1} parent=11 // pred_region
          _
        $region64: #{tpu_custom_call.1} parent=11 // pred_fallthru
          _
        // Predicated region
        $region65: #{tpu_custom_call.1} parent=11 // pred_check
          %p602 = pneg %p450
        $region66: #{tpu_custom_call.1} parent=11 // pred_check_branch
          %604 = sbr.rel (%p602) target = $region68
        $region67: #{tpu_custom_call.1} parent=11 // pred_region
          _
        $region68: #{tpu_custom_call.1} parent=11 // pred_fallthru
          _
        // Predicated region
        $region69: #{tpu_custom_call.1} parent=11 // pred_check
          %p605 = pneg %p471
        $region70: #{tpu_custom_call.1} parent=11 // pred_check_branch
          %607 = sbr.rel (%p605) target = $region72
        $region71: #{tpu_custom_call.1} parent=11 // pred_region
          _
        $region72: #{tpu_custom_call.1} parent=11 // pred_fallthru
          _
        // Predicated region
        $region73: #{tpu_custom_call.1} parent=11 // pred_check
          %p608 = pneg %p492
        $region74: #{tpu_custom_call.1} parent=11 // pred_check_branch
          %610 = sbr.rel (%p608) target = $region76
        $region75: #{tpu_custom_call.1} parent=11 // pred_region
          _
        $region76: #{tpu_custom_call.1} parent=11 // pred_fallthru
          _
      $region12: #{tpu_custom_call.1} parent=5 // pred_fallthru
        _
      %p611 = scmp.lt.s32.totalorder %s36, 2
      // Predicated region
      $region77: #{tpu_custom_call.1} parent=5 // pred_check
        %p612 = pneg %p611
      $region78: #{tpu_custom_call.1} parent=5 // pred_check_branch
        %614 = sbr.rel (%p612) target = $region80
      $region79: #{tpu_custom_call.1} parent=5 // pred_region
        // Predicated region
        $region81: #{tpu_custom_call.1} parent=79 // pred_check
          %p615 = pneg %p70
        $region82: #{tpu_custom_call.1} parent=79 // pred_check_branch
          %617 = sbr.rel (%p615) target = $region84
        $region83: #{tpu_custom_call.1} parent=79 // pred_region
          %p618 = scmp.lt.s32.totalorder %s43, 1
          %s619 = scalar_select %p618, %s43, 1
          %p620 = scmp.lt.s32.totalorder %s44, 0
          %s621 = scalar_select %p620, %s44, 0
          %s622 = sadd.s32 %s621, %s619
          %s623 = smul.addr %s622, 8
          %s624 = scalar_lea.vmem %s0, %s623
        $region84: #{tpu_custom_call.1} parent=79 // pred_fallthru
          _
        // Predicated region
        $region85: #{tpu_custom_call.1} parent=79 // pred_check
          %p625 = pneg %p98
        $region86: #{tpu_custom_call.1} parent=79 // pred_check_branch
          %627 = sbr.rel (%p625) target = $region88
        $region87: #{tpu_custom_call.1} parent=79 // pred_region
          %p628 = scmp.lt.s32.totalorder %s43, 1
          %s629 = scalar_select %p628, %s43, 1
          %p630 = scmp.lt.s32.totalorder %s44, 0
          %s631 = scalar_select %p630, %s44, 0
          %s632 = sadd.s32 %s631, %s629
          %s633 = smul.addr %s632, 8
          %s634 = scalar_lea.vmem %s1, %s633
        $region88: #{tpu_custom_call.1} parent=79 // pred_fallthru
          _
        // Predicated region
        $region89: #{tpu_custom_call.1} parent=79 // pred_check
          %p635 = pneg %p124
        $region90: #{tpu_custom_call.1} parent=79 // pred_check_branch
          %637 = sbr.rel (%p635) target = $region92
        $region91: #{tpu_custom_call.1} parent=79 // pred_region
          %p638 = scmp.lt.s32.totalorder %s43, 1
          %s639 = scalar_select %p638, %s43, 1
          %s640 = smul.addr %s639, 8
          %s641 = scalar_lea.vmem %s2, %s640
        $region92: #{tpu_custom_call.1} parent=79 // pred_fallthru
          _
        // Predicated region
        $region93: #{tpu_custom_call.1} parent=79 // pred_check
          %p642 = pneg %p150
        $region94: #{tpu_custom_call.1} parent=79 // pred_check_branch
          %644 = sbr.rel (%p642) target = $region96
        $region95: #{tpu_custom_call.1} parent=79 // pred_region
          %p645 = scmp.lt.s32.totalorder %s43, 1
          %s646 = scalar_select %p645, %s43, 1
          %s647 = smul.addr %s646, 8
          %s648 = scalar_lea.vmem %s3, %s647
        $region96: #{tpu_custom_call.1} parent=79 // pred_fallthru
          _
      $region80: #{tpu_custom_call.1} parent=5 // pred_fallthru
        _
      %p649 = scmp.le.s32.totalorder 1, %s36
      %p650 = scmp.lt.s32.totalorder %s36, 3
      %p651 = pnand %p649, %p650
      %p652 = pneg %p651
      // Predicated region
      $region97: #{tpu_custom_call.1} parent=5 // pred_check
        _
      $region98: #{tpu_custom_call.1} parent=5 // pred_check_branch
        %654 = sbr.rel (%p651) target = $region100
      $region99: #{tpu_custom_call.1} parent=5 // pred_region
        %s655 = ssub.s32 %s36, 1
        %p656 = scmp.lt.s32.totalorder %s45, 1
        %s657 = scalar_select %p656, %s45, 1
        %p658 = scmp.lt.s32.totalorder %s46, 0
        %s659 = scalar_select %p658, %s46, 0
        %s660 = sadd.s32 %s659, %s657
        %s661 = smul.addr %s660, 8
        %s662 = scalar_lea.vmem %s0, %s661
        %p663 = pneg %p76
        %p664 = pneg %p73
        %p665 = scmp.lt.s32.totalorder %s45, 1
        %s666 = scalar_select %p665, %s45, 1
        %p667 = scmp.lt.s32.totalorder %s46, 0
        %s668 = scalar_select %p667, %s46, 0
        %s669 = sadd.s32 %s668, %s666
        %s670 = smul.addr %s669, 8
        %s671 = scalar_lea.vmem %s1, %s670
        %p672 = pneg %p104
        %p673 = pneg %p101
        %p674 = scmp.lt.s32.totalorder %s45, 1
        %s675 = scalar_select %p674, %s45, 1
        %s676 = smul.addr %s675, 8
        %s677 = scalar_lea.vmem %s2, %s676
        %p678 = pneg %p130
        %p679 = pneg %p127
        %p680 = scmp.lt.s32.totalorder %s45, 1
        %s681 = scalar_select %p680, %s45, 1
        %s682 = smul.addr %s681, 8
        %s683 = scalar_lea.vmem %s3, %s682
        %p684 = pneg %p156
        %p685 = pneg %p153
        %p686 = pneg %p177
        %p687 = pneg %p174
        %p688 = pneg %p198
        %p689 = pneg %p195
        %p690 = pneg %p219
        %p691 = pneg %p216
        %p692 = pneg %p240
        %p693 = pneg %p237
        %p694 = pneg %p261
        %p695 = pneg %p258
        %p696 = pneg %p282
        %p697 = pneg %p279
        %p698 = pneg %p303
        %p699 = pneg %p300
        %p700 = pneg %p324
        %p701 = pneg %p321
        %p702 = pneg %p345
        %p703 = pneg %p342
        %p704 = pneg %p366
        %p705 = pneg %p363
        %p706 = pneg %p387
        %p707 = pneg %p384
        %p708 = pneg %p408
        %p709 = pneg %p405
        %p710 = pneg %p429
        %p711 = pneg %p426
        %p712 = pneg %p450
        %p713 = pneg %p447
        %p714 = pneg %p471
        %p715 = pneg %p468
        %p716 = pneg %p492
        %p717 = pneg %p489
        %p718 = pneg %p520
        %p719 = pneg %p517
        %s720 = sand.u32 %s507, 1
        %s721 = scalar_lea.sflag [#allocation7], %s720
        %s722 = sand.u32 %s507, 1
        %s723 = smul.addr %s722, 8
        %s724 = scalar_lea.vmem [#allocation6], %s723
        %p725 = pneg %p548
        %p726 = pneg %p545
        %s727 = sand.u32 %s535, 1
        %s728 = scalar_lea.sflag [#allocation9], %s727
        %s729 = sand.u32 %s535, 1
        %s730 = smul.addr %s729, 4
        %s731 = scalar_lea.vmem [#allocation8], %s730
        %p732 = scmp.lt.s32.totalorder %s45, 1
        %s733 = scalar_select %p732, %s45, 1
        %p734 = scmp.lt.s32.totalorder %s46, 0
        %s735 = scalar_select %p734, %s46, 0
        %s736 = sadd.s32 %s735, %s733
        %s737 = smul.addr %s736, 8
        %s738 = scalar_lea.vmem %s0, %s737
        %p739 = scmp.lt.s32.totalorder %s45, 1
        %s740 = scalar_select %p739, %s45, 1
        %p741 = scmp.lt.s32.totalorder %s46, 0
        %s742 = scalar_select %p741, %s46, 0
        %s743 = sadd.s32 %s742, %s740
        %s744 = smul.addr %s743, 8
        %s745 = scalar_lea.vmem %s1, %s744
        %p746 = scmp.lt.s32.totalorder %s45, 1
        %s747 = scalar_select %p746, %s45, 1
        %s748 = smul.addr %s747, 8
        %s749 = scalar_lea.vmem %s2, %s748
        %p750 = scmp.lt.s32.totalorder %s45, 1
        %s751 = scalar_select %p750, %s45, 1
        %s752 = smul.addr %s751, 8
        %s753 = scalar_lea.vmem %s3, %s752
        %p754 = scmp.eq.s32.totalorder %s46, 0
        // Predicated region
        $region101: #{tpu_custom_call.1} parent=99 // pred_check
          %p755 = pneg %p754
        $region102: #{tpu_custom_call.1} parent=99 // pred_check_branch
          %757 = sbr.rel (%p755) target = $region104
        $region103: #{tpu_custom_call.1} parent=99 // pred_region
          %v758 = vld [vmem:[%s749] sm:$0xff]
          %v759 = vld [vmem:[%s753] sm:$0xff]
          %v760 = vld [vmem:[%s6] sm:$0xff]
          %v761 = vld [vmem:[%s6 + $0x8] sm:$0xff]
          %v762 = vld [vmem:[%s6 + $0x10] sm:$0xff]
          %v763 = vld [vmem:[%s6 + $0x18] sm:$0xff]
          %v764 = vld [vmem:[%s7] sm:$0x1]
          %v766 = vlaneseq
          %v767 = vshrl.u32 %v766, 7
          %v768 = vsub.s32 0, %v767
          %v769 = vrot.slane %v764, %v768
          %vm771 = vcmask 261120
          %v773 = vsel %vm771, %v758, 0
          %775 = vmatprep.subr.mxu0 0.0
          %776 = vmatpush1.msra.mxu0 %v760
          %777 = vmatprep.subr.mxu0 0.0
          %778 = vmatpush1.msra.mxu0 %v761
          %779 = vmatprep.subr.mxu0 0.0
          %780 = vmatpush1.msra.mxu0 %v762
          %781 = vmatprep.subr.mxu0 0.0
          %782 = vmatpush1.msra.mxu0 %v763
          %783 = vmatprep.subr.mxu0 0.0
          %784 = vmatpush1.msra.mxu0 0.0
          %785 = vmatprep.subr.mxu0 0.0
          %786 = vmatpush1.msra.mxu0 0.0
          %787 = vmatprep.subr.mxu0 0.0
          %788 = vmatpush1.msra.mxu0 0.0
          %789 = vmatprep.subr.mxu0 0.0
          %790 = vmatpush1.msra.mxu0 0.0
          %791 = vmatprep.subr.mxu0 0.0
          %792 = vmatpush1.msra.mxu0 0.0
          %793 = vmatprep.subr.mxu0 0.0
          %794 = vmatpush1.msra.mxu0 0.0
          %795 = vmatprep.subr.mxu0 0.0
          %796 = vmatpush1.msra.mxu0 0.0
          %797 = vmatprep.subr.mxu0 0.0
          %798 = vmatpush1.msra.mxu0 0.0
          %799 = vmatprep.subr.mxu0 0.0
          %800 = vmatpush1.msra.mxu0 0.0
          %801 = vmatprep.subr.mxu0 0.0
          %802 = vmatpush1.msra.mxu0 0.0
          %803 = vmatprep.subr.mxu0 0.0
          %804 = vmatpush1.msra.mxu0 0.0
          %805 = vmatprep.subr.mxu0 0.0
          %806 = vmatpush1.msra.mxu0 0.0
          %807 = vmatprep.subr.mxu0 0.0
          %808 = vmatpush1.msra.mxu0 0.0
          %809 = vmatprep.subr.mxu0 0.0
          %810 = vmatpush1.msra.mxu0 0.0
          %811 = vmatprep.subr.mxu0 0.0
          %812 = vmatpush1.msra.mxu0 0.0
          %813 = vmatprep.subr.mxu0 0.0
          %814 = vmatpush1.msra.mxu0 0.0
          %815 = vmatprep.subr.mxu0 0.0
          %816 = vmatpush1.msra.mxu0 0.0
          %817 = vmatprep.subr.mxu0 0.0
          %818 = vmatpush1.msra.mxu0 0.0
          %819 = vmatprep.subr.mxu0 0.0
          %820 = vmatpush1.msra.mxu0 0.0
          %821 = vmatprep.subr.mxu0 0.0
          %822 = vmatpush1.msra.mxu0 0.0
          %823 = vmatprep.subr.mxu0 0.0
          %824 = vmatpush1.msra.mxu0 0.0
          %825 = vmatprep.subr.mxu0 0.0
          %826 = vmatpush1.msra.mxu0 0.0
          %827 = vmatprep.subr.mxu0 0.0
          %828 = vmatpush1.msra.mxu0 0.0
          %829 = vmatprep.subr.mxu0 0.0
          %830 = vmatpush1.msra.mxu0 0.0
          %831 = vmatprep.subr.mxu0 0.0
          %832 = vmatpush1.msra.mxu0 0.0
          %833 = vmatprep.subr.mxu0 0.0
          %834 = vmatpush1.msra.mxu0 0.0
          %835 = vmatprep.subr.mxu0 0.0
          %836 = vmatpush1.msra.mxu0 0.0
          %837 = vmatprep.subr.mxu0 0.0
          %838 = vmatpush1.msra.mxu0 0.0
          %839 = vmatprep.mubr.f32.mxu0 0.0
          %840 = vmatmul.mubr.f32.gmra.mrb[0].mxu0 %v773
          %v841 = vpop.f32.mrb[0].mxu0
          %v842 = vadd.f32 %v769, %v841
          %v843 = vpop.f32.mrb[0].mxu0
          %844 = vdwg.mxu0
          %v845 = vld [vmem:[%s8] sm:$0xff]
          %v846 = vld [vmem:[%s8 + $0x8] sm:$0xff]
          %v847 = vld [vmem:[%s8 + $0x10] sm:$0xff]
          %v848 = vld [vmem:[%s8 + $0x18] sm:$0xff]
          %v849 = vld [vmem:[%s9] sm:$0x1]
          %v851 = vlaneseq
          %v852 = vshrl.u32 %v851, 7
          %v853 = vsub.s32 0, %v852
          %v854 = vrot.slane %v849, %v853
          %v857 = vsel %vm771, %v759, 0
          %859 = vmatprep.subr.mxu0 0.0
          %860 = vmatpush1.msra.mxu0 %v845
          %861 = vmatprep.subr.mxu0 0.0
          %862 = vmatpush1.msra.mxu0 %v846
          %863 = vmatprep.subr.mxu0 0.0
          %864 = vmatpush1.msra.mxu0 %v847
          %865 = vmatprep.subr.mxu0 0.0
          %866 = vmatpush1.msra.mxu0 %v848
          %867 = vmatprep.subr.mxu0 0.0
          %868 = vmatpush1.msra.mxu0 0.0
          %869 = vmatprep.subr.mxu0 0.0
          %870 = vmatpush1.msra.mxu0 0.0
          %871 = vmatprep.subr.mxu0 0.0
          %872 = vmatpush1.msra.mxu0 0.0
          %873 = vmatprep.subr.mxu0 0.0
          %874 = vmatpush1.msra.mxu0 0.0
          %875 = vmatprep.subr.mxu0 0.0
          %876 = vmatpush1.msra.mxu0 0.0
          %877 = vmatprep.subr.mxu0 0.0
          %878 = vmatpush1.msra.mxu0 0.0
          %879 = vmatprep.subr.mxu0 0.0
          %880 = vmatpush1.msra.mxu0 0.0
          %881 = vmatprep.subr.mxu0 0.0
          %882 = vmatpush1.msra.mxu0 0.0
          %883 = vmatprep.subr.mxu0 0.0
          %884 = vmatpush1.msra.mxu0 0.0
          %885 = vmatprep.subr.mxu0 0.0
          %886 = vmatpush1.msra.mxu0 0.0
          %887 = vmatprep.subr.mxu0 0.0
          %888 = vmatpush1.msra.mxu0 0.0
          %889 = vmatprep.subr.mxu0 0.0
          %890 = vmatpush1.msra.mxu0 0.0
          %891 = vmatprep.subr.mxu0 0.0
          %892 = vmatpush1.msra.mxu0 0.0
          %893 = vmatprep.subr.mxu0 0.0
          %894 = vmatpush1.msra.mxu0 0.0
          %895 = vmatprep.subr.mxu0 0.0
          %896 = vmatpush1.msra.mxu0 0.0
          %897 = vmatprep.subr.mxu0 0.0
          %898 = vmatpush1.msra.mxu0 0.0
          %899 = vmatprep.subr.mxu0 0.0
          %900 = vmatpush1.msra.mxu0 0.0
          %901 = vmatprep.subr.mxu0 0.0
          %902 = vmatpush1.msra.mxu0 0.0
          %903 = vmatprep.subr.mxu0 0.0
          %904 = vmatpush1.msra.mxu0 0.0
          %905 = vmatprep.subr.mxu0 0.0
          %906 = vmatpush1.msra.mxu0 0.0
          %907 = vmatprep.subr.mxu0 0.0
          %908 = vmatpush1.msra.mxu0 0.0
          %909 = vmatprep.subr.mxu0 0.0
          %910 = vmatpush1.msra.mxu0 0.0
          %911 = vmatprep.subr.mxu0 0.0
          %912 = vmatpush1.msra.mxu0 0.0
          %913 = vmatprep.subr.mxu0 0.0
          %914 = vmatpush1.msra.mxu0 0.0
          %915 = vmatprep.subr.mxu0 0.0
          %916 = vmatpush1.msra.mxu0 0.0
          %917 = vmatprep.subr.mxu0 0.0
          %918 = vmatpush1.msra.mxu0 0.0
          %919 = vmatprep.subr.mxu0 0.0
          %920 = vmatpush1.msra.mxu0 0.0
          %921 = vmatprep.subr.mxu0 0.0
          %922 = vmatpush1.msra.mxu0 0.0
          %923 = vmatprep.mubr.f32.mxu0 0.0
          %924 = vmatmul.mubr.f32.gmra.mrb[0].mxu0 %v857
          %v925 = vpop.f32.mrb[0].mxu0
          %v926 = vadd.f32 %v854, %v925
          %v927 = vpop.f32.mrb[0].mxu0
          %928 = vdwg.mxu0
          %vm929 = vcmask 64512
          %930 = vst.msk [vmem:[#allocation2] sm:$0xff] %vm929, %v842
          %931 = vst.msk [vmem:[#allocation3] sm:$0xff] %vm929, %v926
        $region104: #{tpu_custom_call.1} parent=99 // pred_fallthru
          _
        %v932 = vld [vmem:[%s745] sm:$0xff]
        %v933 = vld [vmem:[%s738] sm:$0xff]
        %v934 = vld [vmem:[%s4] sm:$0xff]
        %v935 = vld [vmem:[%s4 + $0x8] sm:$0xff]
        %v936 = vld [vmem:[%s4 + $0x10] sm:$0xff]
        %v937 = vld [vmem:[%s4 + $0x18] sm:$0xff]
        %v938 = vld [vmem:[%s5] sm:$0x1]
        %v940 = vlaneseq
        %v941 = vshrl.u32 %v940, 7
        %v942 = vsub.s32 0, %v941
        %v943 = vrot.slane %v938, %v942
        %vm945 = vcmask 261120
        %v947 = vsel %vm945, %v932, 0
        %949 = vmatprep.subr.mxu0 0.0
        %950 = vmatpush1.msra.mxu0 %v934
        %951 = vmatprep.subr.mxu0 0.0
        %952 = vmatpush1.msra.mxu0 %v935
        %953 = vmatprep.subr.mxu0 0.0
        %954 = vmatpush1.msra.mxu0 %v936
        %955 = vmatprep.subr.mxu0 0.0
        %956 = vmatpush1.msra.mxu0 %v937
        %957 = vmatprep.subr.mxu0 0.0
        %958 = vmatpush1.msra.mxu0 0.0
        %959 = vmatprep.subr.mxu0 0.0
        %960 = vmatpush1.msra.mxu0 0.0
        %961 = vmatprep.subr.mxu0 0.0
        %962 = vmatpush1.msra.mxu0 0.0
        %963 = vmatprep.subr.mxu0 0.0
        %964 = vmatpush1.msra.mxu0 0.0
        %965 = vmatprep.subr.mxu0 0.0
        %966 = vmatpush1.msra.mxu0 0.0
        %967 = vmatprep.subr.mxu0 0.0
        %968 = vmatpush1.msra.mxu0 0.0
        %969 = vmatprep.subr.mxu0 0.0
        %970 = vmatpush1.msra.mxu0 0.0
        %971 = vmatprep.subr.mxu0 0.0
        %972 = vmatpush1.msra.mxu0 0.0
        %973 = vmatprep.subr.mxu0 0.0
        %974 = vmatpush1.msra.mxu0 0.0
        %975 = vmatprep.subr.mxu0 0.0
        %976 = vmatpush1.msra.mxu0 0.0
        %977 = vmatprep.subr.mxu0 0.0
        %978 = vmatpush1.msra.mxu0 0.0
        %979 = vmatprep.subr.mxu0 0.0
        %980 = vmatpush1.msra.mxu0 0.0
        %981 = vmatprep.subr.mxu0 0.0
        %982 = vmatpush1.msra.mxu0 0.0
        %983 = vmatprep.subr.mxu0 0.0
        %984 = vmatpush1.msra.mxu0 0.0
        %985 = vmatprep.subr.mxu0 0.0
        %986 = vmatpush1.msra.mxu0 0.0
        %987 = vmatprep.subr.mxu0 0.0
        %988 = vmatpush1.msra.mxu0 0.0
        %989 = vmatprep.subr.mxu0 0.0
        %990 = vmatpush1.msra.mxu0 0.0
        %991 = vmatprep.subr.mxu0 0.0
        %992 = vmatpush1.msra.mxu0 0.0
        %993 = vmatprep.subr.mxu0 0.0
        %994 = vmatpush1.msra.mxu0 0.0
        %995 = vmatprep.subr.mxu0 0.0
        %996 = vmatpush1.msra.mxu0 0.0
        %997 = vmatprep.subr.mxu0 0.0
        %998 = vmatpush1.msra.mxu0 0.0
        %999 = vmatprep.subr.mxu0 0.0
        %1000 = vmatpush1.msra.mxu0 0.0
        %1001 = vmatprep.subr.mxu0 0.0
        %1002 = vmatpush1.msra.mxu0 0.0
        %1003 = vmatprep.subr.mxu0 0.0
        %1004 = vmatpush1.msra.mxu0 0.0
        %1005 = vmatprep.subr.mxu0 0.0
        %1006 = vmatpush1.msra.mxu0 0.0
        %1007 = vmatprep.subr.mxu0 0.0
        %1008 = vmatpush1.msra.mxu0 0.0
        %1009 = vmatprep.subr.mxu0 0.0
        %1010 = vmatpush1.msra.mxu0 0.0
        %1011 = vmatprep.subr.mxu0 0.0
        %1012 = vmatpush1.msra.mxu0 0.0
        %1013 = vmatprep.mubr.f32.mxu0 0.0
        %1014 = vmatmul.mubr.f32.gmra.mrb[0].mxu0 %v947
        %v1015 = vpop.f32.mrb[0].mxu0
        %v1016 = vadd.f32 %v943, %v1015
        %v1017 = vpop.f32.mrb[0].mxu0
        %1018 = vdwg.mxu0
        %v1019 = vmul.f32 %v1016, 0.35355338
        %v1020 = vld [vmem:[%s10] sm:$0xff]
        %v1021 = vld [vmem:[%s10 + $0x8] sm:$0xff]
        %v1022 = vld [vmem:[%s10 + $0x10] sm:$0xff]
        %v1023 = vld [vmem:[%s10 + $0x18] sm:$0xff]
        %v1024 = vld [vmem:[%s11] sm:$0x1]
        %v1026 = vlaneseq
        %v1027 = vshrl.u32 %v1026, 7
        %v1028 = vsub.s32 0, %v1027
        %v1029 = vrot.slane %v1024, %v1028
        %v1032 = vsel %vm945, %v933, 0
        %1034 = vmatprep.subr.mxu0 0.0
        %1035 = vmatpush1.msra.mxu0 %v1020
        %1036 = vmatprep.subr.mxu0 0.0
        %1037 = vmatpush1.msra.mxu0 %v1021
        %1038 = vmatprep.subr.mxu0 0.0
        %1039 = vmatpush1.msra.mxu0 %v1022
        %1040 = vmatprep.subr.mxu0 0.0
        %1041 = vmatpush1.msra.mxu0 %v1023
        %1042 = vmatprep.subr.mxu0 0.0
        %1043 = vmatpush1.msra.mxu0 0.0
        %1044 = vmatprep.subr.mxu0 0.0
        %1045 = vmatpush1.msra.mxu0 0.0
        %1046 = vmatprep.subr.mxu0 0.0
        %1047 = vmatpush1.msra.mxu0 0.0
        %1048 = vmatprep.subr.mxu0 0.0
        %1049 = vmatpush1.msra.mxu0 0.0
        %1050 = vmatprep.subr.mxu0 0.0
        %1051 = vmatpush1.msra.mxu0 0.0
        %1052 = vmatprep.subr.mxu0 0.0
        %1053 = vmatpush1.msra.mxu0 0.0
        %1054 = vmatprep.subr.mxu0 0.0
        %1055 = vmatpush1.msra.mxu0 0.0
        %1056 = vmatprep.subr.mxu0 0.0
        %1057 = vmatpush1.msra.mxu0 0.0
        %1058 = vmatprep.subr.mxu0 0.0
        %1059 = vmatpush1.msra.mxu0 0.0
        %1060 = vmatprep.subr.mxu0 0.0
        %1061 = vmatpush1.msra.mxu0 0.0
        %1062 = vmatprep.subr.mxu0 0.0
        %1063 = vmatpush1.msra.mxu0 0.0
        %1064 = vmatprep.subr.mxu0 0.0
        %1065 = vmatpush1.msra.mxu0 0.0
        %1066 = vmatprep.subr.mxu0 0.0
        %1067 = vmatpush1.msra.mxu0 0.0
        %1068 = vmatprep.subr.mxu0 0.0
        %1069 = vmatpush1.msra.mxu0 0.0
        %1070 = vmatprep.subr.mxu0 0.0
        %1071 = vmatpush1.msra.mxu0 0.0
        %1072 = vmatprep.subr.mxu0 0.0
        %1073 = vmatpush1.msra.mxu0 0.0
        %1074 = vmatprep.subr.mxu0 0.0
        %1075 = vmatpush1.msra.mxu0 0.0
        %1076 = vmatprep.subr.mxu0 0.0
        %1077 = vmatpush1.msra.mxu0 0.0
        %1078 = vmatprep.subr.mxu0 0.0
        %1079 = vmatpush1.msra.mxu0 0.0
        %1080 = vmatprep.subr.mxu0 0.0
        %1081 = vmatpush1.msra.mxu0 0.0
        %1082 = vmatprep.subr.mxu0 0.0
        %1083 = vmatpush1.msra.mxu0 0.0
        %1084 = vmatprep.subr.mxu0 0.0
        %1085 = vmatpush1.msra.mxu0 0.0
        %1086 = vmatprep.subr.mxu0 0.0
        %1087 = vmatpush1.msra.mxu0 0.0
        %1088 = vmatprep.subr.mxu0 0.0
        %1089 = vmatpush1.msra.mxu0 0.0
        %1090 = vmatprep.subr.mxu0 0.0
        %1091 = vmatpush1.msra.mxu0 0.0
        %1092 = vmatprep.subr.mxu0 0.0
        %1093 = vmatpush1.msra.mxu0 0.0
        %1094 = vmatprep.subr.mxu0 0.0
        %1095 = vmatpush1.msra.mxu0 0.0
        %1096 = vmatprep.subr.mxu0 0.0
        %1097 = vmatpush1.msra.mxu0 0.0
        %1098 = vmatprep.mubr.f32.mxu0 0.0
        %1099 = vmatmul.mubr.f32.gmra.mrb[0].mxu0 %v1032
        %v1100 = vpop.f32.mrb[0].mxu0
        %v1101 = vadd.f32 %v1029, %v1100
        %v1102 = vpop.f32.mrb[0].mxu0
        %1103 = vdwg.mxu0
        %v1104 = vld [vmem:[#allocation2] sm:$0xff]
        %v1105 = vld [vmem:[#allocation3] sm:$0xff]
        %vm1106 = vcmask 64512
        %v1108 = vsel %vm1106, %v1019, 0
        %v1111 = vsel %vm1106, %v1104, 0
        %1113 = vmatprep.subr.mxu0 0.0
        %1114 = vmatpush1.xpose.msra.mxu0 %v1111
        %1115 = vmatprep.subr.mxu0 0.0
        %1116 = vmatpush1.xpose.msra.mxu0 0.0
        %1117 = vmatprep.subr.mxu0 0.0
        %1118 = vmatpush1.xpose.msra.mxu0 0.0
        %1119 = vmatprep.subr.mxu0 0.0
        %1120 = vmatpush1.xpose.msra.mxu0 0.0
        %1121 = vmatprep.subr.mxu0 0.0
        %1122 = vmatpush1.xpose.msra.mxu0 0.0
        %1123 = vmatprep.subr.mxu0 0.0
        %1124 = vmatpush1.xpose.msra.mxu0 0.0
        %1125 = vmatprep.subr.mxu0 0.0
        %1126 = vmatpush1.xpose.msra.mxu0 0.0
        %1127 = vmatprep.subr.mxu0 0.0
        %1128 = vmatpush1.xpose.msra.mxu0 0.0
        %1129 = vmatprep.subr.mxu0 0.0
        %1130 = vmatpush1.xpose.msra.mxu0 0.0
        %1131 = vmatprep.subr.mxu0 0.0
        %1132 = vmatpush1.xpose.msra.mxu0 0.0
        %1133 = vmatprep.subr.mxu0 0.0
        %1134 = vmatpush1.xpose.msra.mxu0 0.0
        %1135 = vmatprep.subr.mxu0 0.0
        %1136 = vmatpush1.xpose.msra.mxu0 0.0
        %1137 = vmatprep.subr.mxu0 0.0
        %1138 = vmatpush1.xpose.msra.mxu0 0.0
        %1139 = vmatprep.subr.mxu0 0.0
        %1140 = vmatpush1.xpose.msra.mxu0 0.0
        %1141 = vmatprep.subr.mxu0 0.0
        %1142 = vmatpush1.xpose.msra.mxu0 0.0
        %1143 = vmatprep.subr.mxu0 0.0
        %1144 = vmatpush1.xpose.msra.mxu0 0.0
        %1145 = vmatprep.subr.mxu0 0.0
        %1146 = vmatpush1.xpose.msra.mxu0 0.0
        %1147 = vmatprep.subr.mxu0 0.0
        %1148 = vmatpush1.xpose.msra.mxu0 0.0
        %1149 = vmatprep.subr.mxu0 0.0
        %1150 = vmatpush1.xpose.msra.mxu0 0.0
        %1151 = vmatprep.subr.mxu0 0.0
        %1152 = vmatpush1.xpose.msra.mxu0 0.0
        %1153 = vmatprep.subr.mxu0 0.0
        %1154 = vmatpush1.xpose.msra.mxu0 0.0
        %1155 = vmatprep.subr.mxu0 0.0
        %1156 = vmatpush1.xpose.msra.mxu0 0.0
        %1157 = vmatprep.subr.mxu0 0.0
        %1158 = vmatpush1.xpose.msra.mxu0 0.0
        %1159 = vmatprep.subr.mxu0 0.0
        %1160 = vmatpush1.xpose.msra.mxu0 0.0
        %1161 = vmatprep.subr.mxu0 0.0
        %1162 = vmatpush1.xpose.msra.mxu0 0.0
        %1163 = vmatprep.subr.mxu0 0.0
        %1164 = vmatpush1.xpose.msra.mxu0 0.0
        %1165 = vmatprep.subr.mxu0 0.0
        %1166 = vmatpush1.xpose.msra.mxu0 0.0
        %1167 = vmatprep.subr.mxu0 0.0
        %1168 = vmatpush1.xpose.msra.mxu0 0.0
        %1169 = vmatprep.subr.mxu0 0.0
        %1170 = vmatpush1.xpose.msra.mxu0 0.0
        %1171 = vmatprep.subr.mxu0 0.0
        %1172 = vmatpush1.xpose.msra.mxu0 0.0
        %1173 = vmatprep.subr.mxu0 0.0
        %1174 = vmatpush1.xpose.msra.mxu0 0.0
        %1175 = vmatprep.subr.mxu0 0.0
        %1176 = vmatpush1.xpose.msra.mxu0 0.0
        %1177 = vmatprep.mubr.f32.mxu0 0.0
        %1178 = vmatmul.mubr.f32.gmra.mrb[0].mxu0 %v1108
        %v1179 = vpop.f32.mrb[0].mxu0
        %v1180 = vadd.f32 0.0, %v1179
        %v1181 = vpop.f32.mrb[0].mxu0
        %1182 = vdwg.mxu0
        %v1183 = vsel %vm1106, %v1180, -inf
        %1184 = vmax.xlane.f32.xlu0 %v1183
        %v1185 = vpop.xlane.xlu0 %1184
        %v1186 = vsub.f32 %v1180, %v1185
        %v1187 = vpack.c.bf16 %v1186, %v1186
        %v1189 = vmul.bf16 %v1187, 1069105081
        %v1190 = vpow.bf16.pop %v1189
        %v1191 = vunpack.c.l.bf16 %v1190
        %v1192 = vsel %vm1106, %v1191, 0.0
        %1193 = vadd.xlane.f32.xlu0 %v1192
        %v1194 = vpop.xlane.xlu0 %1193
        %v1195 = vrcp.pop %v1194
        %v1196 = vmul.f32 %v1191, %v1195
        %v1198 = vsel %vm1106, %v1196, 0
        %1200 = vmatprep.subr.mxu0 0.0
        %1201 = vmatpush1.msra.mxu0 %v1105
        %1202 = vmatprep.subr.mxu0 0.0
        %1203 = vmatpush1.msra.mxu0 0.0
        %1204 = vmatprep.subr.mxu0 0.0
        %1205 = vmatpush1.msra.mxu0 0.0
        %1206 = vmatprep.subr.mxu0 0.0
        %1207 = vmatpush1.msra.mxu0 0.0
        %1208 = vmatprep.subr.mxu0 0.0
        %1209 = vmatpush1.msra.mxu0 0.0
        %1210 = vmatprep.subr.mxu0 0.0
        %1211 = vmatpush1.msra.mxu0 0.0
        %1212 = vmatprep.subr.mxu0 0.0
        %1213 = vmatpush1.msra.mxu0 0.0
        %1214 = vmatprep.subr.mxu0 0.0
        %1215 = vmatpush1.msra.mxu0 0.0
        %1216 = vmatprep.subr.mxu0 0.0
        %1217 = vmatpush1.msra.mxu0 0.0
        %1218 = vmatprep.subr.mxu0 0.0
        %1219 = vmatpush1.msra.mxu0 0.0
        %1220 = vmatprep.subr.mxu0 0.0
        %1221 = vmatpush1.msra.mxu0 0.0
        %1222 = vmatprep.subr.mxu0 0.0
        %1223 = vmatpush1.msra.mxu0 0.0
        %1224 = vmatprep.subr.mxu0 0.0
        %1225 = vmatpush1.msra.mxu0 0.0
        %1226 = vmatprep.subr.mxu0 0.0
        %1227 = vmatpush1.msra.mxu0 0.0
        %1228 = vmatprep.subr.mxu0 0.0
        %1229 = vmatpush1.msra.mxu0 0.0
        %1230 = vmatprep.subr.mxu0 0.0
        %1231 = vmatpush1.msra.mxu0 0.0
        %1232 = vmatprep.subr.mxu0 0.0
        %1233 = vmatpush1.msra.mxu0 0.0
        %1234 = vmatprep.subr.mxu0 0.0
        %1235 = vmatpush1.msra.mxu0 0.0
        %1236 = vmatprep.subr.mxu0 0.0
        %1237 = vmatpush1.msra.mxu0 0.0
        %1238 = vmatprep.subr.mxu0 0.0
        %1239 = vmatpush1.msra.mxu0 0.0
        %1240 = vmatprep.subr.mxu0 0.0
        %1241 = vmatpush1.msra.mxu0 0.0
        %1242 = vmatprep.subr.mxu0 0.0
        %1243 = vmatpush1.msra.mxu0 0.0
        %1244 = vmatprep.subr.mxu0 0.0
        %1245 = vmatpush1.msra.mxu0 0.0
        %1246 = vmatprep.subr.mxu0 0.0
        %1247 = vmatpush1.msra.mxu0 0.0
        %1248 = vmatprep.subr.mxu0 0.0
        %1249 = vmatpush1.msra.mxu0 0.0
        %1250 = vmatprep.subr.mxu0 0.0
        %1251 = vmatpush1.msra.mxu0 0.0
        %1252 = vmatprep.subr.mxu0 0.0
        %1253 = vmatpush1.msra.mxu0 0.0
        %1254 = vmatprep.subr.mxu0 0.0
        %1255 = vmatpush1.msra.mxu0 0.0
        %1256 = vmatprep.subr.mxu0 0.0
        %1257 = vmatpush1.msra.mxu0 0.0
        %1258 = vmatprep.subr.mxu0 0.0
        %1259 = vmatpush1.msra.mxu0 0.0
        %1260 = vmatprep.subr.mxu0 0.0
        %1261 = vmatpush1.msra.mxu0 0.0
        %1262 = vmatprep.subr.mxu0 0.0
        %1263 = vmatpush1.msra.mxu0 0.0
        %1264 = vmatprep.mubr.f32.mxu0 0.0
        %1265 = vmatmul.mubr.f32.gmra.mrb[0].mxu0 %v1198
        %v1266 = vpop.f32.mrb[0].mxu0
        %v1267 = vadd.f32 0.0, %v1266
        %v1268 = vpop.f32.mrb[0].mxu0
        %1269 = vdwg.mxu0
        %s1270 = sld [smem:[#allocation4]]
        %v1271 = vstv %s1270
        %v1272 = vmul.f32 %v1271, %v1267
        %v1273 = vadd.f32 %v1272, %v1101
        %v1274 = vsel %vm1106, %v1273, 0.0
        %1275 = vadd.xlane.f32.xlu0 %v1274
        %v1276 = vpop.xlane.xlu0 %1275
        %v1277 = vrcp.pop 8.0
        %v1278 = vmul.f32 %v1276, %v1277
        %v1279 = vsub.f32 %v1273, %v1278
        %v1280 = vmul.f32 %v1279, %v1279
        %v1281 = vsel %vm1106, %v1280, 0.0
        %1282 = vadd.xlane.f32.xlu0 %v1281
        %v1283 = vpop.xlane.xlu0 %1282
        %v1284 = vmul.f32 %v1283, %v1277
        %v1285 = vadd.f32 %v1284, 1e-06
        %v1286 = vrsqrt.pop %v1285
        %v1287 = vmul.f32 %v1279, %v1286
        %v1288 = vld [vmem:[%s13] sm:$0x1]
        %v1290 = vlaneseq
        %v1291 = vshrl.u32 %v1290, 7
        %v1292 = vsub.s32 0, %v1291
        %v1293 = vrot.slane %v1288, %v1292
        %v1295 = vmul.f32 %v1287, %v1293
        %v1296 = vld [vmem:[%s14] sm:$0x1]
        %v1298 = vlaneseq
        %v1299 = vshrl.u32 %v1298, 7
        %v1300 = vsub.s32 0, %v1299
        %v1301 = vrot.slane %v1296, %v1300
        %v1303 = vadd.f32 %v1295, %v1301
        %v1304 = vld [vmem:[%s15] sm:$0xff]
        %v1305 = vld [vmem:[%s16] sm:$0x1]
        %v1307 = vlaneseq
        %v1308 = vshrl.u32 %v1307, 7
        %v1309 = vsub.s32 0, %v1308
        %v1310 = vrot.slane %v1305, %v1309
        %v1313 = vsel %vm1106, %v1303, 0
        %1315 = vmatprep.subr.mxu0 0.0
        %1316 = vmatpush1.msra.mxu0 %v1304
        %1317 = vmatprep.subr.mxu0 0.0
        %1318 = vmatpush1.msra.mxu0 0.0
        %1319 = vmatprep.subr.mxu0 0.0
        %1320 = vmatpush1.msra.mxu0 0.0
        %1321 = vmatprep.subr.mxu0 0.0
        %1322 = vmatpush1.msra.mxu0 0.0
        %1323 = vmatprep.subr.mxu0 0.0
        %1324 = vmatpush1.msra.mxu0 0.0
        %1325 = vmatprep.subr.mxu0 0.0
        %1326 = vmatpush1.msra.mxu0 0.0
        %1327 = vmatprep.subr.mxu0 0.0
        %1328 = vmatpush1.msra.mxu0 0.0
        %1329 = vmatprep.subr.mxu0 0.0
        %1330 = vmatpush1.msra.mxu0 0.0
        %1331 = vmatprep.subr.mxu0 0.0
        %1332 = vmatpush1.msra.mxu0 0.0
        %1333 = vmatprep.subr.mxu0 0.0
        %1334 = vmatpush1.msra.mxu0 0.0
        %1335 = vmatprep.subr.mxu0 0.0
        %1336 = vmatpush1.msra.mxu0 0.0
        %1337 = vmatprep.subr.mxu0 0.0
        %1338 = vmatpush1.msra.mxu0 0.0
        %1339 = vmatprep.subr.mxu0 0.0
        %1340 = vmatpush1.msra.mxu0 0.0
        %1341 = vmatprep.subr.mxu0 0.0
        %1342 = vmatpush1.msra.mxu0 0.0
        %1343 = vmatprep.subr.mxu0 0.0
        %1344 = vmatpush1.msra.mxu0 0.0
        %1345 = vmatprep.subr.mxu0 0.0
        %1346 = vmatpush1.msra.mxu0 0.0
        %1347 = vmatprep.subr.mxu0 0.0
        %1348 = vmatpush1.msra.mxu0 0.0
        %1349 = vmatprep.subr.mxu0 0.0
        %1350 = vmatpush1.msra.mxu0 0.0
        %1351 = vmatprep.subr.mxu0 0.0
        %1352 = vmatpush1.msra.mxu0 0.0
        %1353 = vmatprep.subr.mxu0 0.0
        %1354 = vmatpush1.msra.mxu0 0.0
        %1355 = vmatprep.subr.mxu0 0.0
        %1356 = vmatpush1.msra.mxu0 0.0
        %1357 = vmatprep.subr.mxu0 0.0
        %1358 = vmatpush1.msra.mxu0 0.0
        %1359 = vmatprep.subr.mxu0 0.0
        %1360 = vmatpush1.msra.mxu0 0.0
        %1361 = vmatprep.subr.mxu0 0.0
        %1362 = vmatpush1.msra.mxu0 0.0
        %1363 = vmatprep.subr.mxu0 0.0
        %1364 = vmatpush1.msra.mxu0 0.0
        %1365 = vmatprep.subr.mxu0 0.0
        %1366 = vmatpush1.msra.mxu0 0.0
        %1367 = vmatprep.subr.mxu0 0.0
        %1368 = vmatpush1.msra.mxu0 0.0
        %1369 = vmatprep.subr.mxu0 0.0
        %1370 = vmatpush1.msra.mxu0 0.0
        %1371 = vmatprep.subr.mxu0 0.0
        %1372 = vmatpush1.msra.mxu0 0.0
        %1373 = vmatprep.subr.mxu0 0.0
        %1374 = vmatpush1.msra.mxu0 0.0
        %1375 = vmatprep.subr.mxu0 0.0
        %1376 = vmatpush1.msra.mxu0 0.0
        %1377 = vmatprep.subr.mxu0 0.0
        %1378 = vmatpush1.msra.mxu0 0.0
        %1379 = vmatprep.mubr.f32.mxu0 0.0
        %1380 = vmatmul.mubr.f32.gmra.mrb[0].mxu0 %v1313
        %v1381 = vpop.f32.mrb[0].mxu0
        %v1382 = vadd.f32 %v1310, %v1381
        %v1383 = vpop.f32.mrb[0].mxu0
        %1384 = vdwg.mxu0
        %v1385 = vmul.f32 %v1382, 0.5
        %v1386 = vmul.f32 %v1382, 0.044715
        %v1387 = vmul.f32 %v1386, %v1382
        %v1388 = vmul.f32 %v1387, %v1382
        %v1389 = vadd.f32 %v1382, %v1388
        %v1390 = vmul.f32 %v1389, 0.7978846
        %v1391 = vtanh.pop %v1390
        %v1392 = vadd.f32 %v1391, 1.0
        %v1393 = vmul.f32 %v1385, %v1392
        %v1394 = vld [vmem:[%s17] sm:$0xff]
        %v1395 = vld [vmem:[%s18] sm:$0x1]
        %v1397 = vlaneseq
        %v1398 = vshrl.u32 %v1397, 7
        %v1399 = vsub.s32 0, %v1398
        %v1400 = vrot.slane %v1395, %v1399
        %v1403 = vsel %vm1106, %v1393, 0
        %1405 = vmatprep.subr.mxu0 0.0
        %1406 = vmatpush1.msra.mxu0 %v1394
        %1407 = vmatprep.subr.mxu0 0.0
        %1408 = vmatpush1.msra.mxu0 0.0
        %1409 = vmatprep.subr.mxu0 0.0
        %1410 = vmatpush1.msra.mxu0 0.0
        %1411 = vmatprep.subr.mxu0 0.0
        %1412 = vmatpush1.msra.mxu0 0.0
        %1413 = vmatprep.subr.mxu0 0.0
        %1414 = vmatpush1.msra.mxu0 0.0
        %1415 = vmatprep.subr.mxu0 0.0
        %1416 = vmatpush1.msra.mxu0 0.0
        %1417 = vmatprep.subr.mxu0 0.0
        %1418 = vmatpush1.msra.mxu0 0.0
        %1419 = vmatprep.subr.mxu0 0.0
        %1420 = vmatpush1.msra.mxu0 0.0
        %1421 = vmatprep.subr.mxu0 0.0
        %1422 = vmatpush1.msra.mxu0 0.0
        %1423 = vmatprep.subr.mxu0 0.0
        %1424 = vmatpush1.msra.mxu0 0.0
        %1425 = vmatprep.subr.mxu0 0.0
        %1426 = vmatpush1.msra.mxu0 0.0
        %1427 = vmatprep.subr.mxu0 0.0
        %1428 = vmatpush1.msra.mxu0 0.0
        %1429 = vmatprep.subr.mxu0 0.0
        %1430 = vmatpush1.msra.mxu0 0.0
        %1431 = vmatprep.subr.mxu0 0.0
        %1432 = vmatpush1.msra.mxu0 0.0
        %1433 = vmatprep.subr.mxu0 0.0
        %1434 = vmatpush1.msra.mxu0 0.0
        %1435 = vmatprep.subr.mxu0 0.0
        %1436 = vmatpush1.msra.mxu0 0.0
        %1437 = vmatprep.subr.mxu0 0.0
        %1438 = vmatpush1.msra.mxu0 0.0
        %1439 = vmatprep.subr.mxu0 0.0
        %1440 = vmatpush1.msra.mxu0 0.0
        %1441 = vmatprep.subr.mxu0 0.0
        %1442 = vmatpush1.msra.mxu0 0.0
        %1443 = vmatprep.subr.mxu0 0.0
        %1444 = vmatpush1.msra.mxu0 0.0
        %1445 = vmatprep.subr.mxu0 0.0
        %1446 = vmatpush1.msra.mxu0 0.0
        %1447 = vmatprep.subr.mxu0 0.0
        %1448 = vmatpush1.msra.mxu0 0.0
        %1449 = vmatprep.subr.mxu0 0.0
        %1450 = vmatpush1.msra.mxu0 0.0
        %1451 = vmatprep.subr.mxu0 0.0
        %1452 = vmatpush1.msra.mxu0 0.0
        %1453 = vmatprep.subr.mxu0 0.0
        %1454 = vmatpush1.msra.mxu0 0.0
        %1455 = vmatprep.subr.mxu0 0.0
        %1456 = vmatpush1.msra.mxu0 0.0
        %1457 = vmatprep.subr.mxu0 0.0
        %1458 = vmatpush1.msra.mxu0 0.0
        %1459 = vmatprep.subr.mxu0 0.0
        %1460 = vmatpush1.msra.mxu0 0.0
        %1461 = vmatprep.subr.mxu0 0.0
        %1462 = vmatpush1.msra.mxu0 0.0
        %1463 = vmatprep.subr.mxu0 0.0
        %1464 = vmatpush1.msra.mxu0 0.0
        %1465 = vmatprep.subr.mxu0 0.0
        %1466 = vmatpush1.msra.mxu0 0.0
        %1467 = vmatprep.subr.mxu0 0.0
        %1468 = vmatpush1.msra.mxu0 0.0
        %1469 = vmatprep.mubr.f32.mxu0 0.0
        %1470 = vmatmul.mubr.f32.gmra.mrb[0].mxu0 %v1403
        %v1471 = vpop.f32.mrb[0].mxu0
        %v1472 = vadd.f32 %v1400, %v1471
        %v1473 = vpop.f32.mrb[0].mxu0
        %1474 = vdwg.mxu0
        %s1475 = sld [smem:[#allocation5]]
        %v1476 = vstv %s1475
        %v1477 = vmul.f32 %v1476, %v1472
        %v1478 = vadd.f32 %v1477, %v1273
        %1479 = vst.msk [vmem:[%s724] sm:$0xff] %vm1106, %v1478
        %v1480 = vpack.c.bf16 %v1196, %v1196
        %vm1481 = vcmask 60416
        %1482 = vst.msk [vmem:[%s731] sm:$0xf] %vm1481, %v1480
        %s1483 = sand.u32 %s507, 1
        %s1484 = scalar_lea.sflag [#allocation7], %s1483
        %s1485 = sand.u32 %s507, 1
        %s1486 = smul.addr %s1485, 8
        %s1487 = scalar_lea.vmem [#allocation6], %s1486
        %s1488 = sand.u32 %s535, 1
        %s1489 = scalar_lea.sflag [#allocation9], %s1488
        %s1490 = sand.u32 %s535, 1
        %s1491 = smul.addr %s1490, 4
        %s1492 = scalar_lea.vmem [#allocation8], %s1491
        // Predicated region
        $region105: #{tpu_custom_call.1} parent=99 // pred_check
          %p1493 = pneg %p517
        $region106: #{tpu_custom_call.1} parent=99 // pred_check_branch
          %1495 = sbr.rel (%p1493) target = $region108
        $region107: #{tpu_custom_call.1} parent=99 // pred_region
          %s1497 = ssub.s32 128, 128
          %1498 = vsyncadd %s1484, %s1497
          %s1499 = sadd.s32 %s46, %s45
          %s1500 = smul.addr %s1499, 128
          %s1501 = scalar_lea.hbm %s20, %s1500
          %s1503 = sshll.u32 %s1487, 4
          %s1504 = int_to_ptr.vmem [resolvable:$true] %s1503
          %1506 = dma.vmem_to_hbm [thread:$0]  %s1504, 128, %s1501, %s1484
        $region108: #{tpu_custom_call.1} parent=99 // pred_fallthru
          _
        // Predicated region
        $region109: #{tpu_custom_call.1} parent=99 // pred_check
          %p1507 = pneg %p545
        $region110: #{tpu_custom_call.1} parent=99 // pred_check_branch
          %1509 = sbr.rel (%p1507) target = $region112
        $region111: #{tpu_custom_call.1} parent=99 // pred_region
          %s1511 = ssub.s32 64, 64
          %1512 = vsyncadd %s1489, %s1511
          %s1513 = sadd.s32 %s46, %s45
          %s1514 = smul.addr %s1513, 64
          %s1515 = scalar_lea.hbm %s21, %s1514
          %s1517 = sshll.u32 %s1492, 4
          %s1518 = int_to_ptr.vmem [resolvable:$true] %s1517
          %1520 = dma.vmem_to_hbm [thread:$0]  %s1518, 64, %s1515, %s1489
        $region112: #{tpu_custom_call.1} parent=99 // pred_fallthru
          _
      $region100: #{tpu_custom_call.1} parent=5 // pred_fallthru
        _
      %p1521 = scmp.le.s32.totalorder 2, %s36
      // Predicated region
      $region113: #{tpu_custom_call.1} parent=5 // pred_check
        %p1522 = pneg %p1521
      $region114: #{tpu_custom_call.1} parent=5 // pred_check_branch
        %1524 = sbr.rel (%p1522) target = $region116
      $region115: #{tpu_custom_call.1} parent=5 // pred_region
        %s1525 = ssub.s32 %s36, 2
        // Predicated region
        $region117: #{tpu_custom_call.1} parent=115 // pred_check
          %p1526 = pneg %p523
        $region118: #{tpu_custom_call.1} parent=115 // pred_check_branch
          %1528 = sbr.rel (%p1526) target = $region120
        $region119: #{tpu_custom_call.1} parent=115 // pred_region
          %s1529 = sand.u32 %s508, 1
          %s1530 = scalar_lea.sflag [#allocation7], %s1529
          %s1531 = sand.u32 %s508, 1
          %s1532 = smul.addr %s1531, 8
          %s1533 = scalar_lea.vmem [#allocation6], %s1532
          %1534 = dma.done %s1530, 128
        $region120: #{tpu_custom_call.1} parent=115 // pred_fallthru
          _
        // Predicated region
        $region121: #{tpu_custom_call.1} parent=115 // pred_check
          %p1535 = pneg %p551
        $region122: #{tpu_custom_call.1} parent=115 // pred_check_branch
          %1537 = sbr.rel (%p1535) target = $region124
        $region123: #{tpu_custom_call.1} parent=115 // pred_region
          %s1538 = sand.u32 %s536, 1
          %s1539 = scalar_lea.sflag [#allocation9], %s1538
          %s1540 = sand.u32 %s536, 1
          %s1541 = smul.addr %s1540, 4
          %s1542 = scalar_lea.vmem [#allocation8], %s1541
          %1543 = dma.done %s1539, 64
        $region124: #{tpu_custom_call.1} parent=115 // pred_fallthru
          _
      $region116: #{tpu_custom_call.1} parent=5 // pred_fallthru
        _
    $region6: #{tpu_custom_call.1} parent=1 // loop_footer
      %s40 = sadd.s32 1, %s36
    $region7: #{tpu_custom_call.1} parent=1 // loop_footer_branch
      %35 = sbr.rel target = $region3
    $region8: #{tpu_custom_call.1} parent=1 // loop_exit
      _
    %1544 = vsyncpa [#allocation7], 1
    %s1545 = scalar_lea.sflag [#allocation7], 1
    %1546 = vsyncpa %s1545, 1
    %1547 = vsyncpa [#allocation9], 1
    %s1548 = scalar_lea.sflag [#allocation9], 1
    %1549 = vsyncpa %s1548, 1

</llo_original>
